<compile_context>
chip_gen: v7x
topology: tpu7x:2x2x1
jax: 0.10.0
libtpu: 0.0.40
codegen_flags: <defaults>
</compile_context>

<pallas_src>
import jax
import jax.numpy as jnp
from jax.experimental import pallas as pl
from jax.experimental.pallas import tpu as pltpu

DROPOUT = 0.1
VOCAB_SIZE = 10
EMBEDDING_DIM = VOCAB_SIZE
HIDDEN_SIZE = 64
SEQ_LEN = 5
NUM_CLASSES = SEQ_LEN * VOCAB_SIZE
NUM_LAYERS = 2

# Padded (kernel) sizes.
H_PAD = 128                      # hidden padded so each gate is one full vreg
GATE_PAD = 4 * H_PAD             # 512
VOCAB_PAD = 16                   # one-hot contraction dim, multiple of 8
OUT_PAD = 128                    # lane-dense output block (>= NUM_CLASSES)
B_SUB = 8                        # sublane group

# PyTorch gate order is (i, f, g, o); kernel uses (i, f, o, g) so the three
# sigmoids act on one contiguous 3*HP slice.
GATE_PERM = (0, 1, 3, 2)


def lstm_fc_kernel(ids_ref, xtab0_ref, whh0_ref, wih1_ref, whh1_ref, b1_ref,
                   wfc_ref, bfc_ref, out_ref, xproj_ref, h0s_ref):
    B = out_ref.shape[0]                 # padded batch (8)
    TB = ids_ref.shape[0]                # T * B
    T = TB // B
    HP = whh0_ref.shape[0]
    VPAD = xtab0_ref.shape[0]

    # ---- Pass A (off the serial chain): batched embedding gather + layer-0
    # input projection + b0 for all timesteps in one MXU op.  Result -> scratch.
    lane_iota = jax.lax.broadcasted_iota(jnp.int32, (TB, VPAD), 1)
    onehot = (ids_ref[...] == lane_iota).astype(jnp.bfloat16)            # (TB, VPAD)
    xproj_ref[...] = jnp.dot(onehot, xtab0_ref[...],
                             preferred_element_type=jnp.float32)          # (TB, 4HP) f32

    def split_gates(gates):
        # Gate layout (i, f, o, g): one contiguous sigmoid, one tanh.
        sg = jax.nn.sigmoid(gates[:, 0:3 * HP])
        i = sg[:, 0 * HP:1 * HP]
        f = sg[:, 1 * HP:2 * HP]
        o = sg[:, 2 * HP:3 * HP]
        g = jnp.tanh(gates[:, 3 * HP:4 * HP])
        return i, f, o, g

    # ---- Layer-0 recurrence: only h0 @ Whh0 (K=128, bf16) on the critical path.
    whh0 = whh0_ref[...]
    h0 = jnp.zeros((B, HP), jnp.float32)
    c0 = jnp.zeros((B, HP), jnp.float32)
    for t in range(T):                                        # T static & tiny -> unrolled
        g0 = xproj_ref[pl.ds(t * B, B), :] + jnp.dot(
            h0.astype(jnp.bfloat16), whh0, preferred_element_type=jnp.float32)
        i0, f0, o0, gg0 = split_gates(g0)
        c0 = f0 * c0 + i0 * gg0
        h0 = o0 * jnp.tanh(c0)
        h0s_ref[pl.ds(t * B, B), :] = h0                      # stack h0_t for pass B

    # TODO(synk): inter-layer dropout (p=0.1) applies only in train mode;
    # inference semantics (identity) implemented here.

    # ---- Pass B (off the serial chain): all layer-1 input projections + b1 in
    # one (TB, HP) @ (HP, 4HP) matmul, overwriting the scratch in place.
    xproj_ref[...] = (jnp.dot(h0s_ref[...].astype(jnp.bfloat16), wih1_ref[...],
                              preferred_element_type=jnp.float32)
                      + jnp.broadcast_to(b1_ref[...], (TB, 4 * HP)))

    # ---- Layer-1 recurrence: only h1 @ Whh1 (K=128, bf16) on the critical path.
    whh1 = whh1_ref[...]
    h1 = jnp.zeros((B, HP), jnp.float32)
    c1 = jnp.zeros((B, HP), jnp.float32)
    for t in range(T):
        g1 = xproj_ref[pl.ds(t * B, B), :] + jnp.dot(
            h1.astype(jnp.bfloat16), whh1, preferred_element_type=jnp.float32)
        i1, f1, o1, gg1 = split_gates(g1)
        c1 = f1 * c1 + i1 * gg1
        h1 = o1 * jnp.tanh(c1)

    # Lane-dense (B, 128) output store; wrapper slices back to NUM_CLASSES.
    out_ref[...] = (jnp.dot(h1.astype(jnp.bfloat16), wfc_ref[...],
                            preferred_element_type=jnp.float32) + bfc_ref[...])


def _pad_gate_cols(w, h, h_pad):
    """(..., 4h) in torch order (i,f,g,o) -> (..., 4*h_pad) in kernel order (i,f,o,g),
    each gate block zero-padded to h_pad columns."""
    parts = []
    for k in GATE_PERM:
        blk = w[..., k * h:(k + 1) * h]
        pad = [(0, 0)] * (w.ndim - 1) + [(0, h_pad - h)]
        parts.append(jnp.pad(blk, pad))
    return jnp.concatenate(parts, axis=-1)


def prepare_params(params):
    """One-time param preprocessing: fold, reorder, zero-pad, cast to bf16."""
    H = HIDDEN_SIZE
    # Layer 0: fold embedding gather + input projection + bias into a per-token table.
    xtab0 = params["embedding"] @ params["wih0_t"] + params["b0"]          # (VOCAB, 4H)
    xtab0 = _pad_gate_cols(xtab0, H, H_PAD)                                # (VOCAB, 4HP)
    xtab0 = jnp.pad(xtab0, ((0, VOCAB_PAD - VOCAB_SIZE), (0, 0)))          # (VPAD, 4HP)

    whh0 = _pad_gate_cols(jnp.pad(params["whh0_t"], ((0, H_PAD - H), (0, 0))), H, H_PAD)
    wih1 = _pad_gate_cols(jnp.pad(params["wih1_t"], ((0, H_PAD - H), (0, 0))), H, H_PAD)
    whh1 = _pad_gate_cols(jnp.pad(params["whh1_t"], ((0, H_PAD - H), (0, 0))), H, H_PAD)
    b1 = _pad_gate_cols(params["b1"], H, H_PAD)                            # (1, 4HP) f32

    wfc = jnp.pad(params["wfc_t"], ((0, H_PAD - H), (0, OUT_PAD - NUM_CLASSES)))
    bfc = jnp.pad(params["bfc"], ((0, 0), (0, OUT_PAD - NUM_CLASSES)))     # (1, 128) f32

    bf16 = jnp.bfloat16
    return {"xtab0": xtab0.astype(bf16), "whh0": whh0.astype(bf16),
            "wih1": wih1.astype(bf16), "whh1": whh1.astype(bf16),
            "b1": b1, "wfc": wfc.astype(bf16), "bfc": bfc}


def custom_model_forward(x_ids, prep):
    """x_ids: (B, SEQ_LEN) int32 token ids -> (B, NUM_CLASSES) float32 logits."""
    B, T = x_ids.shape
    b_pad = max(B_SUB, ((B + B_SUB - 1) // B_SUB) * B_SUB)
    ids_pad = jnp.zeros((b_pad, T), jnp.int32).at[:B, :].set(x_ids.astype(jnp.int32))
    # Time-major flatten (row r = t*b_pad + b) so the kernel's batched one-hot /
    # projection scratch is indexed with a single static sublane slice per step.
    ids_flat = ids_pad.T.reshape(T * b_pad, 1)

    args = (ids_flat, prep["xtab0"], prep["whh0"], prep["wih1"], prep["whh1"],
            prep["b1"], prep["wfc"], prep["bfc"])

    out = pl.pallas_call(
        lstm_fc_kernel,
        out_shape=jax.ShapeDtypeStruct((b_pad, OUT_PAD), jnp.float32),
        in_specs=[pl.BlockSpec(memory_space=pltpu.MemorySpace.VMEM) for _ in args],
        out_specs=pl.BlockSpec(memory_space=pltpu.MemorySpace.VMEM),
        scratch_shapes=[
            pltpu.VMEM((T * b_pad, GATE_PAD), jnp.float32),   # batched x-projections
            pltpu.VMEM((T * b_pad, H_PAD), jnp.float32),      # stacked layer-0 h_t
        ],
        # Note (v7x): at larger batch (>= 2 sublane groups) add a batch grid with
        # dimension_semantics=("parallel",) to use both TensorCores; at B_pad=8 a
        # single invocation is optimal.  VMEM footprint (<1.5 MiB) is a non-issue
        # on every generation.
    )(*args)
    return out[:B, :NUM_CLASSES]


def init_params(key):
    """Deterministic parameter init (same shapes as the PyTorch module)."""
    ks = jax.random.split(key, 12)
    s = 1.0 / jnp.sqrt(jnp.float32(HIDDEN_SIZE))

    def unif(k, shape):
        return jax.random.uniform(k, shape, jnp.float32, -s, s)

    params = {
        "embedding": jax.random.normal(ks[0], (VOCAB_SIZE, EMBEDDING_DIM), jnp.float32),
        # layer 0: W_ih (4H, E), W_hh (4H, H), biases (4H,) -- stored transposed/fused
        "wih0_t": unif(ks[1], (EMBEDDING_DIM, 4 * HIDDEN_SIZE)),
        "whh0_t": unif(ks[2], (HIDDEN_SIZE, 4 * HIDDEN_SIZE)),
        "b0": unif(ks[3], (1, 4 * HIDDEN_SIZE)) + unif(ks[4], (1, 4 * HIDDEN_SIZE)),
        # layer 1
        "wih1_t": unif(ks[5], (HIDDEN_SIZE, 4 * HIDDEN_SIZE)),
        "whh1_t": unif(ks[6], (HIDDEN_SIZE, 4 * HIDDEN_SIZE)),
        "b1": unif(ks[7], (1, 4 * HIDDEN_SIZE)) + unif(ks[8], (1, 4 * HIDDEN_SIZE)),
        # fc: weight (NUM_CLASSES, H), bias (NUM_CLASSES,) -- stored transposed
        "wfc_t": unif(ks[9], (HIDDEN_SIZE, NUM_CLASSES)),
        "bfc": unif(ks[10], (1, NUM_CLASSES)),
    }
    return params


def reference_forward(x_ids, params):
    """Pure-JAX f32 reference mirroring torch nn.LSTM (gate order i, f, g, o)."""
    emb = jnp.take(params["embedding"], x_ids, axis=0)
    B = x_ids.shape[0]
    H = HIDDEN_SIZE

    def cell(x_t, h, c, wih, whh, b):
        gates = x_t @ wih + h @ whh + b
        i = jax.nn.sigmoid(gates[:, 0 * H:1 * H])
        f = jax.nn.sigmoid(gates[:, 1 * H:2 * H])
        g = jnp.tanh(gates[:, 2 * H:3 * H])
        o = jax.nn.sigmoid(gates[:, 3 * H:4 * H])
        c_new = f * c + i * g
        return o * jnp.tanh(c_new), c_new

    h0 = c0 = h1 = c1 = jnp.zeros((B, H), jnp.float32)
    for t in range(SEQ_LEN):
        h0, c0 = cell(emb[:, t, :], h0, c0, params["wih0_t"], params["whh0_t"], params["b0"])
        h1, c1 = cell(h0, h1, c1, params["wih1_t"], params["whh1_t"], params["b1"])
    return h1 @ params["wfc_t"] + params["bfc"]


if __name__ == "__main__":
    key = jax.random.PRNGKey(0)
    pkey, xkey = jax.random.split(key)
    params = init_params(pkey)
    prep = prepare_params(params)   # one-time weight folding / reordering / bf16 cast

    B = 2
    x_ids = jax.random.randint(xkey, (B, SEQ_LEN), 0, VOCAB_SIZE, dtype=jnp.int32)

    logits = jax.jit(custom_model_forward)(x_ids, prep)
    jax.block_until_ready(logits)

    ref = reference_forward(x_ids, params)
    assert logits.shape == (B, NUM_CLASSES)
    # Tolerance covers bf16 weight storage (f32 accumulation/state); observed
    # error is well below this.
    assert jnp.allclose(logits, ref, atol=2e-2, rtol=2e-2), "mismatch vs JAX reference"

    print("KERNEL_OK")
</pallas_src>

<mosaic_0001>
module attributes {stable_mosaic.version = 11 : i64} {
  func.func @lstm_fc_kernel(%arg0: memref<40x1xi32, #tpu.memory_space<vmem>>, %arg1: memref<16x512xbf16, #tpu.memory_space<vmem>>, %arg2: memref<128x512xbf16, #tpu.memory_space<vmem>>, %arg3: memref<128x512xbf16, #tpu.memory_space<vmem>>, %arg4: memref<128x512xbf16, #tpu.memory_space<vmem>>, %arg5: memref<1x512xf32, #tpu.memory_space<vmem>>, %arg6: memref<128x128xbf16, #tpu.memory_space<vmem>>, %arg7: memref<1x128xf32, #tpu.memory_space<vmem>>, %arg8: memref<8x128xf32, #tpu.memory_space<vmem>>, %arg9: memref<40x512xf32, #tpu.memory_space<vmem>>, %arg10: memref<40x128xf32, #tpu.memory_space<vmem>>) attributes {dimension_semantics = [], scalar_prefetch = 0 : i64, scratch_operands = 2 : i64, tpu.core_type = #tpu.core_type<tc>} {
    %0 = tpu.iota {dimensions = array<i32: 1>} : vector<40x16xi32>
    %c0 = arith.constant 0 : index
    %c0_0 = arith.constant 0 : index
    %1 = vector.load %arg0[%c0, %c0_0] : memref<40x1xi32, #tpu.memory_space<vmem>>, vector<40x1xi32>
    %2 = vector.broadcast %1 : vector<40x1xi32> to vector<40x16xi32>
    %3 = arith.cmpi eq, %2, %0 : vector<40x16xi32>
    %4 = arith.extui %3 : vector<40x16xi1> to vector<40x16xi32>
    %5 = arith.sitofp %4 : vector<40x16xi32> to vector<40x16xf32>
    %6 = arith.truncf %5 : vector<40x16xf32> to vector<40x16xbf16>
    %c0_1 = arith.constant 0 : index
    %c0_2 = arith.constant 0 : index
    %7 = vector.load %arg1[%c0_1, %c0_2] : memref<16x512xbf16, #tpu.memory_space<vmem>>, vector<16x512xbf16>
    %cst = arith.constant dense<0.000000e+00> : vector<40x512xf32>
    %8 = tpu.matmul %6, %7, %cst {dimension_numbers = #tpu.dot_dimension_numbers<[1], [0], [0], [1], [0, 0, 1, 1], [], []>} : vector<40x16xbf16>, vector<16x512xbf16>, vector<40x512xf32> -> vector<40x512xf32>
    %c0_3 = arith.constant 0 : index
    %c0_4 = arith.constant 0 : index
    %9 = vector.load %arg9[%c0_3, %c0_4] : memref<40x512xf32, #tpu.memory_space<vmem>>, vector<40x512xf32>
    tpu.vector_store %arg9[%c0_3, %c0_4], %8 {strides = array<i32>} : memref<40x512xf32, #tpu.memory_space<vmem>>, vector<40x512xf32>,
    %c0_5 = arith.constant 0 : index
    %c0_6 = arith.constant 0 : index
    %10 = vector.load %arg2[%c0_5, %c0_6] : memref<128x512xbf16, #tpu.memory_space<vmem>>, vector<128x512xbf16>
    %cst_7 = arith.constant 0.000000e+00 : f32
    %11 = vector.broadcast %cst_7 : f32 to vector<8x128xf32>
    %cst_8 = arith.constant 0.000000e+00 : f32
    %12 = vector.broadcast %cst_8 : f32 to vector<8x128xf32>
    %c0_9 = arith.constant 0 : index
    %c0_10 = arith.constant 0 : index
    %13 = vector.load %arg9[%c0_9, %c0_10] : memref<40x512xf32, #tpu.memory_space<vmem>>, vector<8x512xf32>
    %14 = arith.truncf %11 : vector<8x128xf32> to vector<8x128xbf16>
    %cst_11 = arith.constant dense<0.000000e+00> : vector<8x512xf32>
    %15 = tpu.matmul %14, %10, %cst_11 {dimension_numbers = #tpu.dot_dimension_numbers<[1], [0], [0], [1], [0, 0, 1, 1], [], []>} : vector<8x128xbf16>, vector<128x512xbf16>, vector<8x512xf32> -> vector<8x512xf32>
    %16 = arith.addf %13, %15 : vector<8x512xf32>
    %17 = vector.extract_strided_slice %16 {offsets = [0, 0], sizes = [8, 384], strides = [1, 1]} : vector<8x512xf32> to vector<8x384xf32>
    %18 = arith.negf %17 : vector<8x384xf32>
    %19 = math.exp %18 : vector<8x384xf32>
    %cst_12 = arith.constant 1.000000e+00 : f32
    %20 = vector.broadcast %cst_12 : f32 to vector<8x384xf32>
    %21 = arith.addf %20, %19 : vector<8x384xf32>
    %22 = arith.divf %20, %21 : vector<8x384xf32>
    %23 = vector.extract_strided_slice %22 {offsets = [0, 0], sizes = [8, 128], strides = [1, 1]} : vector<8x384xf32> to vector<8x128xf32>
    %24 = vector.extract_strided_slice %22 {offsets = [0, 128], sizes = [8, 128], strides = [1, 1]} : vector<8x384xf32> to vector<8x128xf32>
    %25 = vector.extract_strided_slice %22 {offsets = [0, 256], sizes = [8, 128], strides = [1, 1]} : vector<8x384xf32> to vector<8x128xf32>
    %26 = vector.extract_strided_slice %16 {offsets = [0, 384], sizes = [8, 128], strides = [1, 1]} : vector<8x512xf32> to vector<8x128xf32>
    %27 = math.tanh %26 : vector<8x128xf32>
    %28 = arith.mulf %24, %12 : vector<8x128xf32>
    %29 = arith.mulf %23, %27 : vector<8x128xf32>
    %30 = arith.addf %28, %29 : vector<8x128xf32>
    %31 = math.tanh %30 : vector<8x128xf32>
    %32 = arith.mulf %25, %31 : vector<8x128xf32>
    %c0_13 = arith.constant 0 : index
    %c0_14 = arith.constant 0 : index
    %33 = vector.load %arg10[%c0_13, %c0_14] : memref<40x128xf32, #tpu.memory_space<vmem>>, vector<8x128xf32>
    tpu.vector_store %arg10[%c0_13, %c0_14], %32 {strides = array<i32>} : memref<40x128xf32, #tpu.memory_space<vmem>>, vector<8x128xf32>,
    %c8 = arith.constant 8 : index
    %c0_15 = arith.constant 0 : index
    %34 = vector.load %arg9[%c8, %c0_15] : memref<40x512xf32, #tpu.memory_space<vmem>>, vector<8x512xf32>
    %35 = arith.truncf %32 : vector<8x128xf32> to vector<8x128xbf16>
    %cst_16 = arith.constant dense<0.000000e+00> : vector<8x512xf32>
    %36 = tpu.matmul %35, %10, %cst_16 {dimension_numbers = #tpu.dot_dimension_numbers<[1], [0], [0], [1], [0, 0, 1, 1], [], []>} : vector<8x128xbf16>, vector<128x512xbf16>, vector<8x512xf32> -> vector<8x512xf32>
    %37 = arith.addf %34, %36 : vector<8x512xf32>
    %38 = vector.extract_strided_slice %37 {offsets = [0, 0], sizes = [8, 384], strides = [1, 1]} : vector<8x512xf32> to vector<8x384xf32>
    %39 = arith.negf %38 : vector<8x384xf32>
    %40 = math.exp %39 : vector<8x384xf32>
    %cst_17 = arith.constant 1.000000e+00 : f32
    %41 = vector.broadcast %cst_17 : f32 to vector<8x384xf32>
    %42 = arith.addf %41, %40 : vector<8x384xf32>
    %43 = arith.divf %41, %42 : vector<8x384xf32>
    %44 = vector.extract_strided_slice %43 {offsets = [0, 0], sizes = [8, 128], strides = [1, 1]} : vector<8x384xf32> to vector<8x128xf32>
    %45 = vector.extract_strided_slice %43 {offsets = [0, 128], sizes = [8, 128], strides = [1, 1]} : vector<8x384xf32> to vector<8x128xf32>
    %46 = vector.extract_strided_slice %43 {offsets = [0, 256], sizes = [8, 128], strides = [1, 1]} : vector<8x384xf32> to vector<8x128xf32>
    %47 = vector.extract_strided_slice %37 {offsets = [0, 384], sizes = [8, 128], strides = [1, 1]} : vector<8x512xf32> to vector<8x128xf32>
    %48 = math.tanh %47 : vector<8x128xf32>
    %49 = arith.mulf %45, %30 : vector<8x128xf32>
    %50 = arith.mulf %44, %48 : vector<8x128xf32>
    %51 = arith.addf %49, %50 : vector<8x128xf32>
    %52 = math.tanh %51 : vector<8x128xf32>
    %53 = arith.mulf %46, %52 : vector<8x128xf32>
    %c8_18 = arith.constant 8 : index
    %c0_19 = arith.constant 0 : index
    %54 = vector.load %arg10[%c8_18, %c0_19] : memref<40x128xf32, #tpu.memory_space<vmem>>, vector<8x128xf32>
    tpu.vector_store %arg10[%c8_18, %c0_19], %53 {strides = array<i32>} : memref<40x128xf32, #tpu.memory_space<vmem>>, vector<8x128xf32>,
    %c16 = arith.constant 16 : index
    %c0_20 = arith.constant 0 : index
    %55 = vector.load %arg9[%c16, %c0_20] : memref<40x512xf32, #tpu.memory_space<vmem>>, vector<8x512xf32>
    %56 = arith.truncf %53 : vector<8x128xf32> to vector<8x128xbf16>
    %cst_21 = arith.constant dense<0.000000e+00> : vector<8x512xf32>
    %57 = tpu.matmul %56, %10, %cst_21 {dimension_numbers = #tpu.dot_dimension_numbers<[1], [0], [0], [1], [0, 0, 1, 1], [], []>} : vector<8x128xbf16>, vector<128x512xbf16>, vector<8x512xf32> -> vector<8x512xf32>
    %58 = arith.addf %55, %57 : vector<8x512xf32>
    %59 = vector.extract_strided_slice %58 {offsets = [0, 0], sizes = [8, 384], strides = [1, 1]} : vector<8x512xf32> to vector<8x384xf32>
    %60 = arith.negf %59 : vector<8x384xf32>
    %61 = math.exp %60 : vector<8x384xf32>
    %cst_22 = arith.constant 1.000000e+00 : f32
    %62 = vector.broadcast %cst_22 : f32 to vector<8x384xf32>
    %63 = arith.addf %62, %61 : vector<8x384xf32>
    %64 = arith.divf %62, %63 : vector<8x384xf32>
    %65 = vector.extract_strided_slice %64 {offsets = [0, 0], sizes = [8, 128], strides = [1, 1]} : vector<8x384xf32> to vector<8x128xf32>
    %66 = vector.extract_strided_slice %64 {offsets = [0, 128], sizes = [8, 128], strides = [1, 1]} : vector<8x384xf32> to vector<8x128xf32>
    %67 = vector.extract_strided_slice %64 {offsets = [0, 256], sizes = [8, 128], strides = [1, 1]} : vector<8x384xf32> to vector<8x128xf32>
    %68 = vector.extract_strided_slice %58 {offsets = [0, 384], sizes = [8, 128], strides = [1, 1]} : vector<8x512xf32> to vector<8x128xf32>
    %69 = math.tanh %68 : vector<8x128xf32>
    %70 = arith.mulf %66, %51 : vector<8x128xf32>
    %71 = arith.mulf %65, %69 : vector<8x128xf32>
    %72 = arith.addf %70, %71 : vector<8x128xf32>
    %73 = math.tanh %72 : vector<8x128xf32>
    %74 = arith.mulf %67, %73 : vector<8x128xf32>
    %c16_23 = arith.constant 16 : index
    %c0_24 = arith.constant 0 : index
    %75 = vector.load %arg10[%c16_23, %c0_24] : memref<40x128xf32, #tpu.memory_space<vmem>>, vector<8x128xf32>
    tpu.vector_store %arg10[%c16_23, %c0_24], %74 {strides = array<i32>} : memref<40x128xf32, #tpu.memory_space<vmem>>, vector<8x128xf32>,
    %c24 = arith.constant 24 : index
    %c0_25 = arith.constant 0 : index
    %76 = vector.load %arg9[%c24, %c0_25] : memref<40x512xf32, #tpu.memory_space<vmem>>, vector<8x512xf32>
    %77 = arith.truncf %74 : vector<8x128xf32> to vector<8x128xbf16>
    %cst_26 = arith.constant dense<0.000000e+00> : vector<8x512xf32>
    %78 = tpu.matmul %77, %10, %cst_26 {dimension_numbers = #tpu.dot_dimension_numbers<[1], [0], [0], [1], [0, 0, 1, 1], [], []>} : vector<8x128xbf16>, vector<128x512xbf16>, vector<8x512xf32> -> vector<8x512xf32>
    %79 = arith.addf %76, %78 : vector<8x512xf32>
    %80 = vector.extract_strided_slice %79 {offsets = [0, 0], sizes = [8, 384], strides = [1, 1]} : vector<8x512xf32> to vector<8x384xf32>
    %81 = arith.negf %80 : vector<8x384xf32>
    %82 = math.exp %81 : vector<8x384xf32>
    %cst_27 = arith.constant 1.000000e+00 : f32
    %83 = vector.broadcast %cst_27 : f32 to vector<8x384xf32>
    %84 = arith.addf %83, %82 : vector<8x384xf32>
    %85 = arith.divf %83, %84 : vector<8x384xf32>
    %86 = vector.extract_strided_slice %85 {offsets = [0, 0], sizes = [8, 128], strides = [1, 1]} : vector<8x384xf32> to vector<8x128xf32>
    %87 = vector.extract_strided_slice %85 {offsets = [0, 128], sizes = [8, 128], strides = [1, 1]} : vector<8x384xf32> to vector<8x128xf32>
    %88 = vector.extract_strided_slice %85 {offsets = [0, 256], sizes = [8, 128], strides = [1, 1]} : vector<8x384xf32> to vector<8x128xf32>
    %89 = vector.extract_strided_slice %79 {offsets = [0, 384], sizes = [8, 128], strides = [1, 1]} : vector<8x512xf32> to vector<8x128xf32>
    %90 = math.tanh %89 : vector<8x128xf32>
    %91 = arith.mulf %87, %72 : vector<8x128xf32>
    %92 = arith.mulf %86, %90 : vector<8x128xf32>
    %93 = arith.addf %91, %92 : vector<8x128xf32>
    %94 = math.tanh %93 : vector<8x128xf32>
    %95 = arith.mulf %88, %94 : vector<8x128xf32>
    %c24_28 = arith.constant 24 : index
    %c0_29 = arith.constant 0 : index
    %96 = vector.load %arg10[%c24_28, %c0_29] : memref<40x128xf32, #tpu.memory_space<vmem>>, vector<8x128xf32>
    tpu.vector_store %arg10[%c24_28, %c0_29], %95 {strides = array<i32>} : memref<40x128xf32, #tpu.memory_space<vmem>>, vector<8x128xf32>,
    %c32 = arith.constant 32 : index
    %c0_30 = arith.constant 0 : index
    %97 = vector.load %arg9[%c32, %c0_30] : memref<40x512xf32, #tpu.memory_space<vmem>>, vector<8x512xf32>
    %98 = arith.truncf %95 : vector<8x128xf32> to vector<8x128xbf16>
    %cst_31 = arith.constant dense<0.000000e+00> : vector<8x512xf32>
    %99 = tpu.matmul %98, %10, %cst_31 {dimension_numbers = #tpu.dot_dimension_numbers<[1], [0], [0], [1], [0, 0, 1, 1], [], []>} : vector<8x128xbf16>, vector<128x512xbf16>, vector<8x512xf32> -> vector<8x512xf32>
    %100 = arith.addf %97, %99 : vector<8x512xf32>
    %101 = vector.extract_strided_slice %100 {offsets = [0, 0], sizes = [8, 384], strides = [1, 1]} : vector<8x512xf32> to vector<8x384xf32>
    %102 = arith.negf %101 : vector<8x384xf32>
    %103 = math.exp %102 : vector<8x384xf32>
    %cst_32 = arith.constant 1.000000e+00 : f32
    %104 = vector.broadcast %cst_32 : f32 to vector<8x384xf32>
    %105 = arith.addf %104, %103 : vector<8x384xf32>
    %106 = arith.divf %104, %105 : vector<8x384xf32>
    %107 = vector.extract_strided_slice %106 {offsets = [0, 0], sizes = [8, 128], strides = [1, 1]} : vector<8x384xf32> to vector<8x128xf32>
    %108 = vector.extract_strided_slice %106 {offsets = [0, 128], sizes = [8, 128], strides = [1, 1]} : vector<8x384xf32> to vector<8x128xf32>
    %109 = vector.extract_strided_slice %106 {offsets = [0, 256], sizes = [8, 128], strides = [1, 1]} : vector<8x384xf32> to vector<8x128xf32>
    %110 = vector.extract_strided_slice %100 {offsets = [0, 384], sizes = [8, 128], strides = [1, 1]} : vector<8x512xf32> to vector<8x128xf32>
    %111 = math.tanh %110 : vector<8x128xf32>
    %112 = arith.mulf %108, %93 : vector<8x128xf32>
    %113 = arith.mulf %107, %111 : vector<8x128xf32>
    %114 = arith.addf %112, %113 : vector<8x128xf32>
    %115 = math.tanh %114 : vector<8x128xf32>
    %116 = arith.mulf %109, %115 : vector<8x128xf32>
    %c32_33 = arith.constant 32 : index
    %c0_34 = arith.constant 0 : index
    %117 = vector.load %arg10[%c32_33, %c0_34] : memref<40x128xf32, #tpu.memory_space<vmem>>, vector<8x128xf32>
    tpu.vector_store %arg10[%c32_33, %c0_34], %116 {strides = array<i32>} : memref<40x128xf32, #tpu.memory_space<vmem>>, vector<8x128xf32>,
    %c0_35 = arith.constant 0 : index
    %c0_36 = arith.constant 0 : index
    %118 = vector.load %arg10[%c0_35, %c0_36] : memref<40x128xf32, #tpu.memory_space<vmem>>, vector<40x128xf32>
    %119 = arith.truncf %118 : vector<40x128xf32> to vector<40x128xbf16>
    %c0_37 = arith.constant 0 : index
    %c0_38 = arith.constant 0 : index
    %120 = vector.load %arg3[%c0_37, %c0_38] : memref<128x512xbf16, #tpu.memory_space<vmem>>, vector<128x512xbf16>
    %cst_39 = arith.constant dense<0.000000e+00> : vector<40x512xf32>
    %121 = tpu.matmul %119, %120, %cst_39 {dimension_numbers = #tpu.dot_dimension_numbers<[1], [0], [0], [1], [0, 0, 1, 1], [], []>} : vector<40x128xbf16>, vector<128x512xbf16>, vector<40x512xf32> -> vector<40x512xf32>
    %c0_40 = arith.constant 0 : index
    %c0_41 = arith.constant 0 : index
    %122 = vector.load %arg5[%c0_40, %c0_41] : memref<1x512xf32, #tpu.memory_space<vmem>>, vector<1x512xf32>
    %123 = vector.shape_cast %122 : vector<1x512xf32> to vector<1x512xf32>
    %124 = vector.broadcast %123 : vector<1x512xf32> to vector<40x512xf32>
    %125 = arith.addf %121, %124 : vector<40x512xf32>
    %c0_42 = arith.constant 0 : index
    %c0_43 = arith.constant 0 : index
    %126 = vector.load %arg9[%c0_42, %c0_43] : memref<40x512xf32, #tpu.memory_space<vmem>>, vector<40x512xf32>
    tpu.vector_store %arg9[%c0_42, %c0_43], %125 {strides = array<i32>} : memref<40x512xf32, #tpu.memory_space<vmem>>, vector<40x512xf32>,
    %c0_44 = arith.constant 0 : index
    %c0_45 = arith.constant 0 : index
    %127 = vector.load %arg4[%c0_44, %c0_45] : memref<128x512xbf16, #tpu.memory_space<vmem>>, vector<128x512xbf16>
    %cst_46 = arith.constant 0.000000e+00 : f32
    %128 = vector.broadcast %cst_46 : f32 to vector<8x128xf32>
    %cst_47 = arith.constant 0.000000e+00 : f32
    %129 = vector.broadcast %cst_47 : f32 to vector<8x128xf32>
    %c0_48 = arith.constant 0 : index
    %c0_49 = arith.constant 0 : index
    %130 = vector.load %arg9[%c0_48, %c0_49] : memref<40x512xf32, #tpu.memory_space<vmem>>, vector<8x512xf32>
    %131 = arith.truncf %128 : vector<8x128xf32> to vector<8x128xbf16>
    %cst_50 = arith.constant dense<0.000000e+00> : vector<8x512xf32>
    %132 = tpu.matmul %131, %127, %cst_50 {dimension_numbers = #tpu.dot_dimension_numbers<[1], [0], [0], [1], [0, 0, 1, 1], [], []>} : vector<8x128xbf16>, vector<128x512xbf16>, vector<8x512xf32> -> vector<8x512xf32>
    %133 = arith.addf %130, %132 : vector<8x512xf32>
    %134 = vector.extract_strided_slice %133 {offsets = [0, 0], sizes = [8, 384], strides = [1, 1]} : vector<8x512xf32> to vector<8x384xf32>
    %135 = arith.negf %134 : vector<8x384xf32>
    %136 = math.exp %135 : vector<8x384xf32>
    %cst_51 = arith.constant 1.000000e+00 : f32
    %137 = vector.broadcast %cst_51 : f32 to vector<8x384xf32>
    %138 = arith.addf %137, %136 : vector<8x384xf32>
    %139 = arith.divf %137, %138 : vector<8x384xf32>
    %140 = vector.extract_strided_slice %139 {offsets = [0, 0], sizes = [8, 128], strides = [1, 1]} : vector<8x384xf32> to vector<8x128xf32>
    %141 = vector.extract_strided_slice %139 {offsets = [0, 128], sizes = [8, 128], strides = [1, 1]} : vector<8x384xf32> to vector<8x128xf32>
    %142 = vector.extract_strided_slice %139 {offsets = [0, 256], sizes = [8, 128], strides = [1, 1]} : vector<8x384xf32> to vector<8x128xf32>
    %143 = vector.extract_strided_slice %133 {offsets = [0, 384], sizes = [8, 128], strides = [1, 1]} : vector<8x512xf32> to vector<8x128xf32>
    %144 = math.tanh %143 : vector<8x128xf32>
    %145 = arith.mulf %141, %129 : vector<8x128xf32>
    %146 = arith.mulf %140, %144 : vector<8x128xf32>
    %147 = arith.addf %145, %146 : vector<8x128xf32>
    %148 = math.tanh %147 : vector<8x128xf32>
    %149 = arith.mulf %142, %148 : vector<8x128xf32>
    %c8_52 = arith.constant 8 : index
    %c0_53 = arith.constant 0 : index
    %150 = vector.load %arg9[%c8_52, %c0_53] : memref<40x512xf32, #tpu.memory_space<vmem>>, vector<8x512xf32>
    %151 = arith.truncf %149 : vector<8x128xf32> to vector<8x128xbf16>
    %cst_54 = arith.constant dense<0.000000e+00> : vector<8x512xf32>
    %152 = tpu.matmul %151, %127, %cst_54 {dimension_numbers = #tpu.dot_dimension_numbers<[1], [0], [0], [1], [0, 0, 1, 1], [], []>} : vector<8x128xbf16>, vector<128x512xbf16>, vector<8x512xf32> -> vector<8x512xf32>
    %153 = arith.addf %150, %152 : vector<8x512xf32>
    %154 = vector.extract_strided_slice %153 {offsets = [0, 0], sizes = [8, 384], strides = [1, 1]} : vector<8x512xf32> to vector<8x384xf32>
    %155 = arith.negf %154 : vector<8x384xf32>
    %156 = math.exp %155 : vector<8x384xf32>
    %cst_55 = arith.constant 1.000000e+00 : f32
    %157 = vector.broadcast %cst_55 : f32 to vector<8x384xf32>
    %158 = arith.addf %157, %156 : vector<8x384xf32>
    %159 = arith.divf %157, %158 : vector<8x384xf32>
    %160 = vector.extract_strided_slice %159 {offsets = [0, 0], sizes = [8, 128], strides = [1, 1]} : vector<8x384xf32> to vector<8x128xf32>
    %161 = vector.extract_strided_slice %159 {offsets = [0, 128], sizes = [8, 128], strides = [1, 1]} : vector<8x384xf32> to vector<8x128xf32>
    %162 = vector.extract_strided_slice %159 {offsets = [0, 256], sizes = [8, 128], strides = [1, 1]} : vector<8x384xf32> to vector<8x128xf32>
    %163 = vector.extract_strided_slice %153 {offsets = [0, 384], sizes = [8, 128], strides = [1, 1]} : vector<8x512xf32> to vector<8x128xf32>
    %164 = math.tanh %163 : vector<8x128xf32>
    %165 = arith.mulf %161, %147 : vector<8x128xf32>
    %166 = arith.mulf %160, %164 : vector<8x128xf32>
    %167 = arith.addf %165, %166 : vector<8x128xf32>
    %168 = math.tanh %167 : vector<8x128xf32>
    %169 = arith.mulf %162, %168 : vector<8x128xf32>
    %c16_56 = arith.constant 16 : index
    %c0_57 = arith.constant 0 : index
    %170 = vector.load %arg9[%c16_56, %c0_57] : memref<40x512xf32, #tpu.memory_space<vmem>>, vector<8x512xf32>
    %171 = arith.truncf %169 : vector<8x128xf32> to vector<8x128xbf16>
    %cst_58 = arith.constant dense<0.000000e+00> : vector<8x512xf32>
    %172 = tpu.matmul %171, %127, %cst_58 {dimension_numbers = #tpu.dot_dimension_numbers<[1], [0], [0], [1], [0, 0, 1, 1], [], []>} : vector<8x128xbf16>, vector<128x512xbf16>, vector<8x512xf32> -> vector<8x512xf32>
    %173 = arith.addf %170, %172 : vector<8x512xf32>
    %174 = vector.extract_strided_slice %173 {offsets = [0, 0], sizes = [8, 384], strides = [1, 1]} : vector<8x512xf32> to vector<8x384xf32>
    %175 = arith.negf %174 : vector<8x384xf32>
    %176 = math.exp %175 : vector<8x384xf32>
    %cst_59 = arith.constant 1.000000e+00 : f32
    %177 = vector.broadcast %cst_59 : f32 to vector<8x384xf32>
    %178 = arith.addf %177, %176 : vector<8x384xf32>
    %179 = arith.divf %177, %178 : vector<8x384xf32>
    %180 = vector.extract_strided_slice %179 {offsets = [0, 0], sizes = [8, 128], strides = [1, 1]} : vector<8x384xf32> to vector<8x128xf32>
    %181 = vector.extract_strided_slice %179 {offsets = [0, 128], sizes = [8, 128], strides = [1, 1]} : vector<8x384xf32> to vector<8x128xf32>
    %182 = vector.extract_strided_slice %179 {offsets = [0, 256], sizes = [8, 128], strides = [1, 1]} : vector<8x384xf32> to vector<8x128xf32>
    %183 = vector.extract_strided_slice %173 {offsets = [0, 384], sizes = [8, 128], strides = [1, 1]} : vector<8x512xf32> to vector<8x128xf32>
    %184 = math.tanh %183 : vector<8x128xf32>
    %185 = arith.mulf %181, %167 : vector<8x128xf32>
    %186 = arith.mulf %180, %184 : vector<8x128xf32>
    %187 = arith.addf %185, %186 : vector<8x128xf32>
    %188 = math.tanh %187 : vector<8x128xf32>
    %189 = arith.mulf %182, %188 : vector<8x128xf32>
    %c24_60 = arith.constant 24 : index
    %c0_61 = arith.constant 0 : index
    %190 = vector.load %arg9[%c24_60, %c0_61] : memref<40x512xf32, #tpu.memory_space<vmem>>, vector<8x512xf32>
    %191 = arith.truncf %189 : vector<8x128xf32> to vector<8x128xbf16>
    %cst_62 = arith.constant dense<0.000000e+00> : vector<8x512xf32>
    %192 = tpu.matmul %191, %127, %cst_62 {dimension_numbers = #tpu.dot_dimension_numbers<[1], [0], [0], [1], [0, 0, 1, 1], [], []>} : vector<8x128xbf16>, vector<128x512xbf16>, vector<8x512xf32> -> vector<8x512xf32>
    %193 = arith.addf %190, %192 : vector<8x512xf32>
    %194 = vector.extract_strided_slice %193 {offsets = [0, 0], sizes = [8, 384], strides = [1, 1]} : vector<8x512xf32> to vector<8x384xf32>
    %195 = arith.negf %194 : vector<8x384xf32>
    %196 = math.exp %195 : vector<8x384xf32>
    %cst_63 = arith.constant 1.000000e+00 : f32
    %197 = vector.broadcast %cst_63 : f32 to vector<8x384xf32>
    %198 = arith.addf %197, %196 : vector<8x384xf32>
    %199 = arith.divf %197, %198 : vector<8x384xf32>
    %200 = vector.extract_strided_slice %199 {offsets = [0, 0], sizes = [8, 128], strides = [1, 1]} : vector<8x384xf32> to vector<8x128xf32>
    %201 = vector.extract_strided_slice %199 {offsets = [0, 128], sizes = [8, 128], strides = [1, 1]} : vector<8x384xf32> to vector<8x128xf32>
    %202 = vector.extract_strided_slice %199 {offsets = [0, 256], sizes = [8, 128], strides = [1, 1]} : vector<8x384xf32> to vector<8x128xf32>
    %203 = vector.extract_strided_slice %193 {offsets = [0, 384], sizes = [8, 128], strides = [1, 1]} : vector<8x512xf32> to vector<8x128xf32>
    %204 = math.tanh %203 : vector<8x128xf32>
    %205 = arith.mulf %201, %187 : vector<8x128xf32>
    %206 = arith.mulf %200, %204 : vector<8x128xf32>
    %207 = arith.addf %205, %206 : vector<8x128xf32>
    %208 = math.tanh %207 : vector<8x128xf32>
    %209 = arith.mulf %202, %208 : vector<8x128xf32>
    %c32_64 = arith.constant 32 : index
    %c0_65 = arith.constant 0 : index
    %210 = vector.load %arg9[%c32_64, %c0_65] : memref<40x512xf32, #tpu.memory_space<vmem>>, vector<8x512xf32>
    %211 = arith.truncf %209 : vector<8x128xf32> to vector<8x128xbf16>
    %cst_66 = arith.constant dense<0.000000e+00> : vector<8x512xf32>
    %212 = tpu.matmul %211, %127, %cst_66 {dimension_numbers = #tpu.dot_dimension_numbers<[1], [0], [0], [1], [0, 0, 1, 1], [], []>} : vector<8x128xbf16>, vector<128x512xbf16>, vector<8x512xf32> -> vector<8x512xf32>
    %213 = arith.addf %210, %212 : vector<8x512xf32>
    %214 = vector.extract_strided_slice %213 {offsets = [0, 0], sizes = [8, 384], strides = [1, 1]} : vector<8x512xf32> to vector<8x384xf32>
    %215 = arith.negf %214 : vector<8x384xf32>
    %216 = math.exp %215 : vector<8x384xf32>
    %cst_67 = arith.constant 1.000000e+00 : f32
    %217 = vector.broadcast %cst_67 : f32 to vector<8x384xf32>
    %218 = arith.addf %217, %216 : vector<8x384xf32>
    %219 = arith.divf %217, %218 : vector<8x384xf32>
    %220 = vector.extract_strided_slice %219 {offsets = [0, 0], sizes = [8, 128], strides = [1, 1]} : vector<8x384xf32> to vector<8x128xf32>
    %221 = vector.extract_strided_slice %219 {offsets = [0, 128], sizes = [8, 128], strides = [1, 1]} : vector<8x384xf32> to vector<8x128xf32>
    %222 = vector.extract_strided_slice %219 {offsets = [0, 256], sizes = [8, 128], strides = [1, 1]} : vector<8x384xf32> to vector<8x128xf32>
    %223 = vector.extract_strided_slice %213 {offsets = [0, 384], sizes = [8, 128], strides = [1, 1]} : vector<8x512xf32> to vector<8x128xf32>
    %224 = math.tanh %223 : vector<8x128xf32>
    %225 = arith.mulf %221, %207 : vector<8x128xf32>
    %226 = arith.mulf %220, %224 : vector<8x128xf32>
    %227 = arith.addf %225, %226 : vector<8x128xf32>
    %228 = math.tanh %227 : vector<8x128xf32>
    %229 = arith.mulf %222, %228 : vector<8x128xf32>
    %230 = arith.truncf %229 : vector<8x128xf32> to vector<8x128xbf16>
    %c0_68 = arith.constant 0 : index
    %c0_69 = arith.constant 0 : index
    %231 = vector.load %arg6[%c0_68, %c0_69] : memref<128x128xbf16, #tpu.memory_space<vmem>>, vector<128x128xbf16>
    %cst_70 = arith.constant dense<0.000000e+00> : vector<8x128xf32>
    %232 = tpu.matmul %230, %231, %cst_70 {dimension_numbers = #tpu.dot_dimension_numbers<[1], [0], [0], [1], [0, 0, 1, 1], [], []>} : vector<8x128xbf16>, vector<128x128xbf16>, vector<8x128xf32> -> vector<8x128xf32>
    %c0_71 = arith.constant 0 : index
    %c0_72 = arith.constant 0 : index
    %233 = vector.load %arg7[%c0_71, %c0_72] : memref<1x128xf32, #tpu.memory_space<vmem>>, vector<1x128xf32>
    %234 = vector.broadcast %233 : vector<1x128xf32> to vector<8x128xf32>
    %235 = arith.addf %232, %234 : vector<8x128xf32>
    %c0_73 = arith.constant 0 : index
    %c0_74 = arith.constant 0 : index
    %236 = vector.load %arg8[%c0_73, %c0_74] : memref<8x128xf32, #tpu.memory_space<vmem>>, vector<8x128xf32>
    tpu.vector_store %arg8[%c0_73, %c0_74], %235 {strides = array<i32>} : memref<8x128xf32, #tpu.memory_space<vmem>>, vector<8x128xf32>,
    return
  }
}

</mosaic_0001>

<llo_original>
// kernel: custom_model_forward.1
$region0: #{custom_model_forward.1}
  #allocation0 [shape = 'u32[]', space=smem, size = 0x4, offset = 0x4, fixed_abs, tag = 'smem constant byte address 0x4 - core index']
  #allocation1 [shape = 'u32[144,128]{1,0:T(1,128)}', space=vmem, size = 0x12000, scoped, tag = 'internal scratch']
  #allocation2 [shape = 'f32[40,512]{1,0:T(8,128)}', space=vmem, size = 0x14000, scoped, tag = 'scratch operand']
  #allocation3 [shape = 'f32[40,128]{1,0:T(8,128)}', space=vmem, size = 0x5000, scoped, tag = 'scratch operand']
  %s0 = inlined_call_operand.vmem [shape: s32[40,1], index: 0, kind: input, shape index: {}]
  %s1 = inlined_call_operand.vmem [shape: bf16[16,512], index: 1, kind: input, shape index: {}]
  %s2 = inlined_call_operand.hbm [shape: bf16[128,512], index: 2, kind: input, shape index: {}]
  %s3 = inlined_call_operand.hbm [shape: bf16[128,512], index: 3, kind: input, shape index: {}]
  %s4 = inlined_call_operand.hbm [shape: bf16[128,512], index: 4, kind: input, shape index: {}]
  %s5 = inlined_call_operand.hbm [shape: f32[1,512], index: 5, kind: input, shape index: {}]
  %s6 = inlined_call_operand.vmem [shape: bf16[128,128], index: 6, kind: input, shape index: {}]
  %s7 = inlined_call_operand.hbm [shape: f32[1,128], index: 7, kind: input, shape index: {}]
  %s8 = inlined_call_operand.vmem [shape: f32[8,128], index: 8, kind: output, shape index: {}]
  %s9 = sld [smem:[#allocation0]]
  $region62: #{custom_model_forward.1} parent=0
    _
  %s11 = ssub.s32 1, %s9
  %s12 = scalar_select 0, %s11, %s9
  $region1: #{custom_model_forward.1} parent=0
    #allocation4 [shape = 'u8[131072]{0}', space=vmem, size = 0x20000, scoped, tag = 'input window, operand 2, single buffered']
    #allocation5 [shape = 's32[1]{0}', space=sflag, size = 0x4, scoped, tag = 'scoped memory for custom_model_forward.1']
    #allocation6 [shape = 'u8[131072]{0}', space=vmem, size = 0x20000, scoped, tag = 'input window, operand 3, single buffered']
    #allocation7 [shape = 's32[1]{0}', space=sflag, size = 0x4, scoped, tag = 'scoped memory for custom_model_forward.1']
    #allocation8 [shape = 'u8[131072]{0}', space=vmem, size = 0x20000, scoped, tag = 'input window, operand 4, single buffered']
    #allocation9 [shape = 'u8[2048]{0}', space=vmem, size = 0x800, scoped, tag = 'input window, operand 5, single buffered']
    #allocation10 [shape = 's32[1]{0}', space=sflag, size = 0x4, scoped, tag = 'scoped memory for custom_model_forward.1']
    #allocation11 [shape = 'u8[512]{0}', space=vmem, size = 0x400, scoped, tag = 'input window, operand 7, single buffered']
    %13 = vsyncpa [#allocation5], 0
    %14 = vsyncpa [#allocation7], 0
    %15 = vsyncpa [#allocation10], 0
    // Predicated region
    $region2: #{custom_model_forward.1} parent=1 // pred_check
      _
    $region3: #{custom_model_forward.1} parent=1 // pred_check_branch
      %17 = sbr.rel (0) target = $region5
    $region4: #{custom_model_forward.1} parent=1 // pred_region
      _
    $region5: #{custom_model_forward.1} parent=1 // pred_fallthru
      _
    // Predicated region
    $region6: #{custom_model_forward.1} parent=1 // pred_check
      _
    $region7: #{custom_model_forward.1} parent=1 // pred_check_branch
      %19 = sbr.rel (0) target = $region9
    $region8: #{custom_model_forward.1} parent=1 // pred_region
      _
    $region9: #{custom_model_forward.1} parent=1 // pred_fallthru
      _
    // Predicated region
    $region10: #{custom_model_forward.1} parent=1 // pred_check
      _
    $region11: #{custom_model_forward.1} parent=1 // pred_check_branch
      %21 = sbr.rel (0) target = $region13
    $region12: #{custom_model_forward.1} parent=1 // pred_region
      %s23 = ssub.s32 4096, 4096
      %24 = vsyncadd [#allocation5], %s23
      %s25 = sshll.u32 [#allocation4], 4
      %s26 = int_to_ptr.vmem [resolvable:$true] %s25
      %31 = dma.hbm_to_vmem [thread:$0]  %s2, 4096, %s26, [#allocation5], 256, 256, 16
    $region13: #{custom_model_forward.1} parent=1 // pred_fallthru
      _
    // Predicated region
    $region14: #{custom_model_forward.1} parent=1 // pred_check
      _
    $region15: #{custom_model_forward.1} parent=1 // pred_check_branch
      %33 = sbr.rel (0) target = $region17
    $region16: #{custom_model_forward.1} parent=1 // pred_region
      %s35 = ssub.s32 4096, 4096
      %36 = vsyncadd [#allocation7], %s35
      %s37 = sshll.u32 [#allocation6], 4
      %s38 = int_to_ptr.vmem [resolvable:$true] %s37
      %43 = dma.hbm_to_vmem [thread:$0]  %s3, 4096, %s38, [#allocation7], 256, 256, 16
    $region17: #{custom_model_forward.1} parent=1 // pred_fallthru
      _
    // Predicated region
    $region18: #{custom_model_forward.1} parent=1 // pred_check
      _
    $region19: #{custom_model_forward.1} parent=1 // pred_check_branch
      %45 = sbr.rel (0) target = $region21
    $region20: #{custom_model_forward.1} parent=1 // pred_region
      %s47 = ssub.s32 4096, 4096
      %48 = vsyncadd [#allocation7], %s47
      %s49 = sshll.u32 [#allocation8], 4
      %s50 = int_to_ptr.vmem [resolvable:$true] %s49
      %55 = dma.hbm_to_vmem [thread:$0]  %s4, 4096, %s50, [#allocation7], 256, 256, 16
    $region21: #{custom_model_forward.1} parent=1 // pred_fallthru
      _
    // Predicated region
    $region22: #{custom_model_forward.1} parent=1 // pred_check
      _
    $region23: #{custom_model_forward.1} parent=1 // pred_check_branch
      %57 = sbr.rel (0) target = $region25
    $region24: #{custom_model_forward.1} parent=1 // pred_region
      %s59 = ssub.s32 64, 64
      %60 = vsyncadd [#allocation10], %s59
      %s62 = sshll.u32 [#allocation9], 4
      %s63 = int_to_ptr.vmem [resolvable:$true] %s62
      %65 = dma.hbm_to_vmem [thread:$0]  %s5, 64, %s63, [#allocation10]
    $region25: #{custom_model_forward.1} parent=1 // pred_fallthru
      _
    // Predicated region
    $region26: #{custom_model_forward.1} parent=1 // pred_check
      _
    $region27: #{custom_model_forward.1} parent=1 // pred_check_branch
      %67 = sbr.rel (0) target = $region29
    $region28: #{custom_model_forward.1} parent=1 // pred_region
      _
    $region29: #{custom_model_forward.1} parent=1 // pred_fallthru
      _
    // Predicated region
    $region30: #{custom_model_forward.1} parent=1 // pred_check
      _
    $region31: #{custom_model_forward.1} parent=1 // pred_check_branch
      %69 = sbr.rel (0) target = $region33
    $region32: #{custom_model_forward.1} parent=1 // pred_region
      %s71 = ssub.s32 16, 16
      %72 = vsyncadd [#allocation10], %s71
      %s74 = sshll.u32 [#allocation11], 4
      %s75 = int_to_ptr.vmem [resolvable:$true] %s74
      %77 = dma.hbm_to_vmem [thread:$0]  %s7, 16, %s75, [#allocation10]
    $region33: #{custom_model_forward.1} parent=1 // pred_fallthru
      _
    // Predicated region
    $region34: #{custom_model_forward.1} parent=1 // pred_check
      _
    $region35: #{custom_model_forward.1} parent=1 // pred_check_branch
      %79 = sbr.rel (0) target = $region37
    $region36: #{custom_model_forward.1} parent=1 // pred_region
      %80 = dma.done [#allocation5], 4096
    $region37: #{custom_model_forward.1} parent=1 // pred_fallthru
      _
    // Predicated region
    $region38: #{custom_model_forward.1} parent=1 // pred_check
      _
    $region39: #{custom_model_forward.1} parent=1 // pred_check_branch
      %82 = sbr.rel (0) target = $region41
    $region40: #{custom_model_forward.1} parent=1 // pred_region
      %83 = dma.done [#allocation7], 4096
    $region41: #{custom_model_forward.1} parent=1 // pred_fallthru
      _
    // Predicated region
    $region42: #{custom_model_forward.1} parent=1 // pred_check
      _
    $region43: #{custom_model_forward.1} parent=1 // pred_check_branch
      %85 = sbr.rel (0) target = $region45
    $region44: #{custom_model_forward.1} parent=1 // pred_region
      %86 = dma.done [#allocation7], 4096
    $region45: #{custom_model_forward.1} parent=1 // pred_fallthru
      _
    // Predicated region
    $region46: #{custom_model_forward.1} parent=1 // pred_check
      _
    $region47: #{custom_model_forward.1} parent=1 // pred_check_branch
      %88 = sbr.rel (0) target = $region49
    $region48: #{custom_model_forward.1} parent=1 // pred_region
      %89 = dma.done [#allocation10], 64
    $region49: #{custom_model_forward.1} parent=1 // pred_fallthru
      _
    // Predicated region
    $region50: #{custom_model_forward.1} parent=1 // pred_check
      _
    $region51: #{custom_model_forward.1} parent=1 // pred_check_branch
      %91 = sbr.rel (0) target = $region53
    $region52: #{custom_model_forward.1} parent=1 // pred_region
      %92 = dma.done [#allocation10], 16
    $region53: #{custom_model_forward.1} parent=1 // pred_fallthru
      _
    %v94 = vlaneseq
    %v95 = vand.u32 %v94, 127
    %v96 = vld [vmem:[%s0] sm:$0xff]
    %v97 = vld [vmem:[%s0 + $0x8] sm:$0xff]
    %v98 = vld [vmem:[%s0 + $0x10] sm:$0xff]
    %v99 = vld [vmem:[%s0 + $0x18] sm:$0xff]
    %v100 = vld [vmem:[%s0 + $0x20] sm:$0xff]
    %101 = vset.pattern.permute.xlu0 0
    %102 = vperm.xlu0 %101, %v96
    %v103 = vpop.permute.xlu0 %102
    %104 = vset.pattern.permute.xlu0 0
    %105 = vperm.xlu0 %104, %v97
    %v106 = vpop.permute.xlu0 %105
    %107 = vset.pattern.permute.xlu0 0
    %108 = vperm.xlu0 %107, %v98
    %v109 = vpop.permute.xlu0 %108
    %110 = vset.pattern.permute.xlu0 0
    %111 = vperm.xlu0 %110, %v99
    %v112 = vpop.permute.xlu0 %111
    %113 = vset.pattern.permute.xlu0 0
    %114 = vperm.xlu0 %113, %v100
    %v115 = vpop.permute.xlu0 %114
    %vm116 = vcmp.eq.s32.totalorder %v103, %v95
    %vm117 = vcmp.eq.s32.totalorder %v106, %v95
    %vm118 = vcmp.eq.s32.totalorder %v109, %v95
    %vm119 = vcmp.eq.s32.totalorder %v112, %v95
    %vm120 = vcmp.eq.s32.totalorder %v115, %v95
    %v121 = vsel %vm116, 1, 0
    %v122 = vsel %vm117, 1, 0
    %v123 = vsel %vm118, 1, 0
    %v124 = vsel %vm119, 1, 0
    %v125 = vsel %vm120, 1, 0
    %v126 = vcvt.s32.f32 %v121
    %v127 = vcvt.s32.f32 %v122
    %v128 = vcvt.s32.f32 %v123
    %v129 = vcvt.s32.f32 %v124
    %v130 = vcvt.s32.f32 %v125
    %v131 = vpack.c.bf16 %v127, %v126
    %v132 = vpack.c.bf16 %v129, %v128
    %v133 = vpack.c.bf16 %v130, %v130
    %v134 = vld [vmem:[%s1] sm:$0xff]
    %v135 = vld [vmem:[%s1 + $0x8] sm:$0xff]
    %v136 = vld [vmem:[%s1 + $0x10] sm:$0xff]
    %v137 = vld [vmem:[%s1 + $0x18] sm:$0xff]
    %v142 = vunpack.c.l.b16 %v134
    %v143 = vunpack.c.h.b16 %v134
    %v144 = vunpack.c.l.b16 %v135
    %v145 = vunpack.c.h.b16 %v135
    %v146 = vunpack.c.l.b16 %v136
    %v147 = vunpack.c.h.b16 %v136
    %v148 = vunpack.c.l.b16 %v137
    %v149 = vunpack.c.h.b16 %v137
    %v150 = vpack.c.b16 %v146, %v142
    %v151 = vpack.c.b16 %v147, %v143
    %v152 = vpack.c.b16 %v148, %v144
    %v153 = vpack.c.b16 %v149, %v145
    %vm158 = vcmask 130048
    %v160 = vsel %vm158, %v131, 0
    %v163 = vsel %vm158, %v132, 0
    %v166 = vsel %vm158, %v133, 0
    %168 = vmatprep.subr.bf16.mxu0 %v151
    %169 = vmatpush1.bf16.msra.mxu0 %v150
    %170 = vmatprep.subr.bf16.mxu0 0
    %171 = vmatpush1.bf16.msra.mxu0 0
    %172 = vmatprep.subr.bf16.mxu0 0
    %173 = vmatpush1.bf16.msra.mxu0 0
    %174 = vmatprep.subr.bf16.mxu0 0
    %175 = vmatpush1.bf16.msra.mxu0 0
    %176 = vmatprep.subr.bf16.mxu0 0
    %177 = vmatpush1.bf16.msra.mxu0 0
    %178 = vmatprep.subr.bf16.mxu0 0
    %179 = vmatpush1.bf16.msra.mxu0 0
    %180 = vmatprep.subr.bf16.mxu0 0
    %181 = vmatpush1.bf16.msra.mxu0 0
    %182 = vmatprep.subr.bf16.mxu0 0
    %183 = vmatpush1.bf16.msra.mxu0 0
    %184 = vmatprep.subr.bf16.mxu0 0
    %185 = vmatpush1.bf16.msra.mxu0 0
    %186 = vmatprep.subr.bf16.mxu0 0
    %187 = vmatpush1.bf16.msra.mxu0 0
    %188 = vmatprep.subr.bf16.mxu0 0
    %189 = vmatpush1.bf16.msra.mxu0 0
    %190 = vmatprep.subr.bf16.mxu0 0
    %191 = vmatpush1.bf16.msra.mxu0 0
    %192 = vmatprep.subr.bf16.mxu0 0
    %193 = vmatpush1.bf16.msra.mxu0 0
    %194 = vmatprep.subr.bf16.mxu0 0
    %195 = vmatpush1.bf16.msra.mxu0 0
    %196 = vmatprep.subr.bf16.mxu0 0
    %197 = vmatpush1.bf16.msra.mxu0 0
    %198 = vmatprep.subr.bf16.mxu0 0
    %199 = vmatpush1.bf16.msra.mxu0 0
    %200 = vmatprep.mubr.bf16.mxu0 0
    %201 = vmatmul.mubr.bf16.gmra.mrb[0].mxu0 %v160
    %v202 = vpop.f32.mrb[0].mxu0
    %v203 = vadd.f32 0.0, %v202
    %v204 = vpop.f32.mrb[0].mxu0
    %v205 = vadd.f32 0.0, %v204
    %v206 = vpop.f32.mrb[0].mxu0
    %v207 = vadd.f32 0.0, %v206
    %v208 = vpop.f32.mrb[0].mxu0
    %v209 = vadd.f32 0.0, %v208
    %210 = vmatprep.mubr.bf16.mxu0 0
    %211 = vmatmul.mubr.bf16.gmra.mrb[0].mxu0 %v163
    %v212 = vpop.f32.mrb[0].mxu0
    %v213 = vadd.f32 0.0, %v212
    %v214 = vpop.f32.mrb[0].mxu0
    %v215 = vadd.f32 0.0, %v214
    %v216 = vpop.f32.mrb[0].mxu0
    %v217 = vadd.f32 0.0, %v216
    %v218 = vpop.f32.mrb[0].mxu0
    %v219 = vadd.f32 0.0, %v218
    %220 = vmatprep.mubr.bf16.mxu0 0
    %221 = vmatmul.mubr.bf16.gmra.mrb[0].mxu0 %v166
    %v222 = vpop.f32.mrb[0].mxu0
    %v223 = vadd.f32 0.0, %v222
    %v224 = vpop.f32.mrb[0].mxu0
    %v225 = vadd.f32 0.0, %v224
    %v226 = vpop.f32.mrb[0].mxu0
    %v227 = vpop.f32.mrb[0].mxu0
    %228 = vdwg.mxu0
    %229 = vmatprep.subr.bf16.mxu0 %v153
    %230 = vmatpush1.bf16.msra.mxu0 %v152
    %231 = vmatprep.subr.bf16.mxu0 0
    %232 = vmatpush1.bf16.msra.mxu0 0
    %233 = vmatprep.subr.bf16.mxu0 0
    %234 = vmatpush1.bf16.msra.mxu0 0
    %235 = vmatprep.subr.bf16.mxu0 0
    %236 = vmatpush1.bf16.msra.mxu0 0
    %237 = vmatprep.subr.bf16.mxu0 0
    %238 = vmatpush1.bf16.msra.mxu0 0
    %239 = vmatprep.subr.bf16.mxu0 0
    %240 = vmatpush1.bf16.msra.mxu0 0
    %241 = vmatprep.subr.bf16.mxu0 0
    %242 = vmatpush1.bf16.msra.mxu0 0
    %243 = vmatprep.subr.bf16.mxu0 0
    %244 = vmatpush1.bf16.msra.mxu0 0
    %245 = vmatprep.subr.bf16.mxu0 0
    %246 = vmatpush1.bf16.msra.mxu0 0
    %247 = vmatprep.subr.bf16.mxu0 0
    %248 = vmatpush1.bf16.msra.mxu0 0
    %249 = vmatprep.subr.bf16.mxu0 0
    %250 = vmatpush1.bf16.msra.mxu0 0
    %251 = vmatprep.subr.bf16.mxu0 0
    %252 = vmatpush1.bf16.msra.mxu0 0
    %253 = vmatprep.subr.bf16.mxu0 0
    %254 = vmatpush1.bf16.msra.mxu0 0
    %255 = vmatprep.subr.bf16.mxu0 0
    %256 = vmatpush1.bf16.msra.mxu0 0
    %257 = vmatprep.subr.bf16.mxu0 0
    %258 = vmatpush1.bf16.msra.mxu0 0
    %259 = vmatprep.subr.bf16.mxu0 0
    %260 = vmatpush1.bf16.msra.mxu0 0
    %261 = vmatprep.mubr.bf16.mxu0 0
    %262 = vmatmul.mubr.bf16.gmra.mrb[0].mxu0 %v160
    %v263 = vpop.f32.mrb[0].mxu0
    %v264 = vadd.f32 0.0, %v263
    %v265 = vpop.f32.mrb[0].mxu0
    %v266 = vadd.f32 0.0, %v265
    %v267 = vpop.f32.mrb[0].mxu0
    %v268 = vadd.f32 0.0, %v267
    %v269 = vpop.f32.mrb[0].mxu0
    %v270 = vadd.f32 0.0, %v269
    %271 = vmatprep.mubr.bf16.mxu0 0
    %272 = vmatmul.mubr.bf16.gmra.mrb[0].mxu0 %v163
    %v273 = vpop.f32.mrb[0].mxu0
    %v274 = vadd.f32 0.0, %v273
    %v275 = vpop.f32.mrb[0].mxu0
    %v276 = vadd.f32 0.0, %v275
    %v277 = vpop.f32.mrb[0].mxu0
    %v278 = vadd.f32 0.0, %v277
    %v279 = vpop.f32.mrb[0].mxu0
    %v280 = vadd.f32 0.0, %v279
    %281 = vmatprep.mubr.bf16.mxu0 0
    %282 = vmatmul.mubr.bf16.gmra.mrb[0].mxu0 %v166
    %v283 = vpop.f32.mrb[0].mxu0
    %v284 = vadd.f32 0.0, %v283
    %v285 = vpop.f32.mrb[0].mxu0
    %v286 = vadd.f32 0.0, %v285
    %v287 = vpop.f32.mrb[0].mxu0
    %v288 = vpop.f32.mrb[0].mxu0
    %289 = vdwg.mxu0
    %290 = vst [vmem:[#allocation2] sm:$0xff] %v203
    %291 = vst [vmem:[#allocation2 + $0x8] sm:$0xff] %v205
    %292 = vst [vmem:[#allocation2 + $0x10] sm:$0xff] %v264
    %293 = vst [vmem:[#allocation2 + $0x18] sm:$0xff] %v266
    %294 = vst [vmem:[#allocation2 + $0x20] sm:$0xff] %v207
    %295 = vst [vmem:[#allocation2 + $0x28] sm:$0xff] %v209
    %296 = vst [vmem:[#allocation2 + $0x30] sm:$0xff] %v268
    %297 = vst [vmem:[#allocation2 + $0x38] sm:$0xff] %v270
    %298 = vst [vmem:[#allocation2 + $0x40] sm:$0xff] %v213
    %299 = vst [vmem:[#allocation2 + $0x48] sm:$0xff] %v215
    %300 = vst [vmem:[#allocation2 + $0x50] sm:$0xff] %v274
    %301 = vst [vmem:[#allocation2 + $0x58] sm:$0xff] %v276
    %302 = vst [vmem:[#allocation2 + $0x60] sm:$0xff] %v217
    %303 = vst [vmem:[#allocation2 + $0x68] sm:$0xff] %v219
    %304 = vst [vmem:[#allocation2 + $0x70] sm:$0xff] %v278
    %305 = vst [vmem:[#allocation2 + $0x78] sm:$0xff] %v280
    %306 = vst [vmem:[#allocation2 + $0x80] sm:$0xff] %v223
    %307 = vst [vmem:[#allocation2 + $0x88] sm:$0xff] %v225
    %308 = vst [vmem:[#allocation2 + $0x90] sm:$0xff] %v284
    %309 = vst [vmem:[#allocation2 + $0x98] sm:$0xff] %v286
    %v310 = vld [vmem:[#allocation4] sm:$0xff]
    %v311 = vld [vmem:[#allocation4 + $0x8] sm:$0xff]
    %v312 = vld [vmem:[#allocation4 + $0x10] sm:$0xff]
    %v313 = vld [vmem:[#allocation4 + $0x18] sm:$0xff]
    %v314 = vld [vmem:[#allocation4 + $0x20] sm:$0xff]
    %v315 = vld [vmem:[#allocation4 + $0x28] sm:$0xff]
    %v316 = vld [vmem:[#allocation4 + $0x30] sm:$0xff]
    %v317 = vld [vmem:[#allocation4 + $0x38] sm:$0xff]
    %v318 = vld [vmem:[#allocation4 + $0x40] sm:$0xff]
    %v319 = vld [vmem:[#allocation4 + $0x48] sm:$0xff]
    %v320 = vld [vmem:[#allocation4 + $0x50] sm:$0xff]
    %v321 = vld [vmem:[#allocation4 + $0x58] sm:$0xff]
    %v322 = vld [vmem:[#allocation4 + $0x60] sm:$0xff]
    %v323 = vld [vmem:[#allocation4 + $0x68] sm:$0xff]
    %v324 = vld [vmem:[#allocation4 + $0x70] sm:$0xff]
    %v325 = vld [vmem:[#allocation4 + $0x78] sm:$0xff]
    %v326 = vld [vmem:[#allocation4 + $0x80] sm:$0xff]
    %v327 = vld [vmem:[#allocation4 + $0x88] sm:$0xff]
    %v328 = vld [vmem:[#allocation4 + $0x90] sm:$0xff]
    %v329 = vld [vmem:[#allocation4 + $0x98] sm:$0xff]
    %v330 = vld [vmem:[#allocation4 + $0xa0] sm:$0xff]
    %v331 = vld [vmem:[#allocation4 + $0xa8] sm:$0xff]
    %v332 = vld [vmem:[#allocation4 + $0xb0] sm:$0xff]
    %v333 = vld [vmem:[#allocation4 + $0xb8] sm:$0xff]
    %v334 = vld [vmem:[#allocation4 + $0xc0] sm:$0xff]
    %v335 = vld [vmem:[#allocation4 + $0xc8] sm:$0xff]
    %v336 = vld [vmem:[#allocation4 + $0xd0] sm:$0xff]
    %v337 = vld [vmem:[#allocation4 + $0xd8] sm:$0xff]
    %v338 = vld [vmem:[#allocation4 + $0xe0] sm:$0xff]
    %v339 = vld [vmem:[#allocation4 + $0xe8] sm:$0xff]
    %v340 = vld [vmem:[#allocation4 + $0xf0] sm:$0xff]
    %v341 = vld [vmem:[#allocation4 + $0xf8] sm:$0xff]
    %v342 = vld [vmem:[#allocation2] sm:$0xff]
    %v343 = vld [vmem:[#allocation2 + $0x8] sm:$0xff]
    %v344 = vld [vmem:[#allocation2 + $0x10] sm:$0xff]
    %v345 = vld [vmem:[#allocation2 + $0x18] sm:$0xff]
    %v378 = vunpack.c.l.b16 %v310
    %v379 = vunpack.c.h.b16 %v310
    %v380 = vunpack.c.l.b16 %v311
    %v381 = vunpack.c.h.b16 %v311
    %v382 = vunpack.c.l.b16 %v312
    %v383 = vunpack.c.h.b16 %v312
    %v384 = vunpack.c.l.b16 %v313
    %v385 = vunpack.c.h.b16 %v313
    %v386 = vunpack.c.l.b16 %v314
    %v387 = vunpack.c.h.b16 %v314
    %v388 = vunpack.c.l.b16 %v315
    %v389 = vunpack.c.h.b16 %v315
    %v390 = vunpack.c.l.b16 %v316
    %v391 = vunpack.c.h.b16 %v316
    %v392 = vunpack.c.l.b16 %v317
    %v393 = vunpack.c.h.b16 %v317
    %v394 = vunpack.c.l.b16 %v318
    %v395 = vunpack.c.h.b16 %v318
    %v396 = vunpack.c.l.b16 %v319
    %v397 = vunpack.c.h.b16 %v319
    %v398 = vunpack.c.l.b16 %v320
    %v399 = vunpack.c.h.b16 %v320
    %v400 = vunpack.c.l.b16 %v321
    %v401 = vunpack.c.h.b16 %v321
    %v402 = vunpack.c.l.b16 %v322
    %v403 = vunpack.c.h.b16 %v322
    %v404 = vunpack.c.l.b16 %v323
    %v405 = vunpack.c.h.b16 %v323
    %v406 = vunpack.c.l.b16 %v324
    %v407 = vunpack.c.h.b16 %v324
    %v408 = vunpack.c.l.b16 %v325
    %v409 = vunpack.c.h.b16 %v325
    %v410 = vunpack.c.l.b16 %v326
    %v411 = vunpack.c.h.b16 %v326
    %v412 = vunpack.c.l.b16 %v327
    %v413 = vunpack.c.h.b16 %v327
    %v414 = vunpack.c.l.b16 %v328
    %v415 = vunpack.c.h.b16 %v328
    %v416 = vunpack.c.l.b16 %v329
    %v417 = vunpack.c.h.b16 %v329
    %v418 = vunpack.c.l.b16 %v330
    %v419 = vunpack.c.h.b16 %v330
    %v420 = vunpack.c.l.b16 %v331
    %v421 = vunpack.c.h.b16 %v331
    %v422 = vunpack.c.l.b16 %v332
    %v423 = vunpack.c.h.b16 %v332
    %v424 = vunpack.c.l.b16 %v333
    %v425 = vunpack.c.h.b16 %v333
    %v426 = vunpack.c.l.b16 %v334
    %v427 = vunpack.c.h.b16 %v334
    %v428 = vunpack.c.l.b16 %v335
    %v429 = vunpack.c.h.b16 %v335
    %v430 = vunpack.c.l.b16 %v336
    %v431 = vunpack.c.h.b16 %v336
    %v432 = vunpack.c.l.b16 %v337
    %v433 = vunpack.c.h.b16 %v337
    %v434 = vunpack.c.l.b16 %v338
    %v435 = vunpack.c.h.b16 %v338
    %v436 = vunpack.c.l.b16 %v339
    %v437 = vunpack.c.h.b16 %v339
    %v438 = vunpack.c.l.b16 %v340
    %v439 = vunpack.c.h.b16 %v340
    %v440 = vunpack.c.l.b16 %v341
    %v441 = vunpack.c.h.b16 %v341
    %v442 = vpack.c.b16 %v382, %v378
    %v443 = vpack.c.b16 %v383, %v379
    %v444 = vpack.c.b16 %v384, %v380
    %v445 = vpack.c.b16 %v385, %v381
    %v446 = vpack.c.b16 %v390, %v386
    %v447 = vpack.c.b16 %v391, %v387
    %v448 = vpack.c.b16 %v392, %v388
    %v449 = vpack.c.b16 %v393, %v389
    %v450 = vpack.c.b16 %v398, %v394
    %v451 = vpack.c.b16 %v399, %v395
    %v452 = vpack.c.b16 %v400, %v396
    %v453 = vpack.c.b16 %v401, %v397
    %v454 = vpack.c.b16 %v406, %v402
    %v455 = vpack.c.b16 %v407, %v403
    %v456 = vpack.c.b16 %v408, %v404
    %v457 = vpack.c.b16 %v409, %v405
    %v458 = vpack.c.b16 %v414, %v410
    %v459 = vpack.c.b16 %v415, %v411
    %v460 = vpack.c.b16 %v416, %v412
    %v461 = vpack.c.b16 %v417, %v413
    %v462 = vpack.c.b16 %v422, %v418
    %v463 = vpack.c.b16 %v423, %v419
    %v464 = vpack.c.b16 %v424, %v420
    %v465 = vpack.c.b16 %v425, %v421
    %v466 = vpack.c.b16 %v430, %v426
    %v467 = vpack.c.b16 %v431, %v427
    %v468 = vpack.c.b16 %v432, %v428
    %v469 = vpack.c.b16 %v433, %v429
    %v470 = vpack.c.b16 %v438, %v434
    %v471 = vpack.c.b16 %v439, %v435
    %v472 = vpack.c.b16 %v440, %v436
    %v473 = vpack.c.b16 %v441, %v437
    %506 = vmatprep.subr.bf16.mxu0 %v443
    %507 = vmatpush1.bf16.msra.mxu0 %v442
    %508 = vmatprep.subr.bf16.mxu0 %v447
    %509 = vmatpush1.bf16.msra.mxu0 %v446
    %510 = vmatprep.subr.bf16.mxu0 %v451
    %511 = vmatpush1.bf16.msra.mxu0 %v450
    %512 = vmatprep.subr.bf16.mxu0 %v455
    %513 = vmatpush1.bf16.msra.mxu0 %v454
    %514 = vmatprep.subr.bf16.mxu0 %v459
    %515 = vmatpush1.bf16.msra.mxu0 %v458
    %516 = vmatprep.subr.bf16.mxu0 %v463
    %517 = vmatpush1.bf16.msra.mxu0 %v462
    %518 = vmatprep.subr.bf16.mxu0 %v467
    %519 = vmatpush1.bf16.msra.mxu0 %v466
    %520 = vmatprep.subr.bf16.mxu0 %v471
    %521 = vmatpush1.bf16.msra.mxu0 %v470
    %522 = vmatprep.subr.bf16.mxu0 0
    %523 = vmatpush1.bf16.msra.mxu0 0
    %524 = vmatprep.subr.bf16.mxu0 0
    %525 = vmatpush1.bf16.msra.mxu0 0
    %526 = vmatprep.subr.bf16.mxu0 0
    %527 = vmatpush1.bf16.msra.mxu0 0
    %528 = vmatprep.subr.bf16.mxu0 0
    %529 = vmatpush1.bf16.msra.mxu0 0
    %530 = vmatprep.subr.bf16.mxu0 0
    %531 = vmatpush1.bf16.msra.mxu0 0
    %532 = vmatprep.subr.bf16.mxu0 0
    %533 = vmatpush1.bf16.msra.mxu0 0
    %534 = vmatprep.subr.bf16.mxu0 0
    %535 = vmatpush1.bf16.msra.mxu0 0
    %536 = vmatprep.subr.bf16.mxu0 0
    %537 = vmatpush1.bf16.msra.mxu0 0
    %538 = vmatprep.mubr.bf16.mxu0 0
    %539 = vmatmul.mubr.bf16.gmra.mrb[0].mxu0 0
    %v540 = vpop.f32.mrb[0].mxu0
    %v541 = vadd.f32 0.0, %v540
    %v542 = vpop.f32.mrb[0].mxu0
    %v543 = vadd.f32 0.0, %v542
    %v544 = vpop.f32.mrb[0].mxu0
    %v545 = vpop.f32.mrb[0].mxu0
    %546 = vdwg.mxu0
    %547 = vmatprep.subr.bf16.mxu0 %v445
    %548 = vmatpush1.bf16.msra.mxu0 %v444
    %549 = vmatprep.subr.bf16.mxu0 %v449
    %550 = vmatpush1.bf16.msra.mxu0 %v448
    %551 = vmatprep.subr.bf16.mxu0 %v453
    %552 = vmatpush1.bf16.msra.mxu0 %v452
    %553 = vmatprep.subr.bf16.mxu0 %v457
    %554 = vmatpush1.bf16.msra.mxu0 %v456
    %555 = vmatprep.subr.bf16.mxu0 %v461
    %556 = vmatpush1.bf16.msra.mxu0 %v460
    %557 = vmatprep.subr.bf16.mxu0 %v465
    %558 = vmatpush1.bf16.msra.mxu0 %v464
    %559 = vmatprep.subr.bf16.mxu0 %v469
    %560 = vmatpush1.bf16.msra.mxu0 %v468
    %561 = vmatprep.subr.bf16.mxu0 %v473
    %562 = vmatpush1.bf16.msra.mxu0 %v472
    %563 = vmatprep.subr.bf16.mxu0 0
    %564 = vmatpush1.bf16.msra.mxu0 0
    %565 = vmatprep.subr.bf16.mxu0 0
    %566 = vmatpush1.bf16.msra.mxu0 0
    %567 = vmatprep.subr.bf16.mxu0 0
    %568 = vmatpush1.bf16.msra.mxu0 0
    %569 = vmatprep.subr.bf16.mxu0 0
    %570 = vmatpush1.bf16.msra.mxu0 0
    %571 = vmatprep.subr.bf16.mxu0 0
    %572 = vmatpush1.bf16.msra.mxu0 0
    %573 = vmatprep.subr.bf16.mxu0 0
    %574 = vmatpush1.bf16.msra.mxu0 0
    %575 = vmatprep.subr.bf16.mxu0 0
    %576 = vmatpush1.bf16.msra.mxu0 0
    %577 = vmatprep.subr.bf16.mxu0 0
    %578 = vmatpush1.bf16.msra.mxu0 0
    %579 = vmatprep.mubr.bf16.mxu0 0
    %580 = vmatmul.mubr.bf16.gmra.mrb[0].mxu0 0
    %v581 = vpop.f32.mrb[0].mxu0
    %v582 = vadd.f32 0.0, %v581
    %v583 = vpop.f32.mrb[0].mxu0
    %v584 = vadd.f32 0.0, %v583
    %v585 = vpop.f32.mrb[0].mxu0
    %v586 = vpop.f32.mrb[0].mxu0
    %587 = vdwg.mxu0
    %v588 = vadd.f32 %v342, %v541
    %v589 = vadd.f32 %v343, %v543
    %v590 = vadd.f32 %v344, %v582
    %v591 = vadd.f32 %v345, %v584
    %v592 = vxor.u32 %v588, 2147483648
    %v593 = vxor.u32 %v589, 2147483648
    %v594 = vxor.u32 %v590, 2147483648
    %v595 = vmul.f32 %v592, 1.442695
    %v596 = vpow.pop %v595
    %v597 = vmul.f32 %v593, 1.442695
    %v598 = vpow.pop %v597
    %v599 = vmul.f32 %v594, 1.442695
    %v600 = vpow.pop %v599
    %v601 = vadd.f32 %v596, 1.0
    %v602 = vadd.f32 %v598, 1.0
    %v603 = vadd.f32 %v600, 1.0
    %v604 = vrcp.pop %v601
    %v605 = vmul.f32 1.0, %v604
    %v606 = vrcp.pop %v602
    %v607 = vmul.f32 1.0, %v606
    %v608 = vrcp.pop %v603
    %v609 = vmul.f32 1.0, %v608
    %v610 = vtanh.pop %v591
    %v611 = vmul.f32 %v607, 0.0
    %v612 = vmul.f32 %v605, %v610
    %v613 = vadd.f32 %v611, %v612
    %v614 = vtanh.pop %v613
    %v615 = vmul.f32 %v609, %v614
    %616 = vst [vmem:[#allocation3] sm:$0xff] %v615
    %v617 = vld [vmem:[#allocation2 + $0x20] sm:$0xff]
    %v618 = vld [vmem:[#allocation2 + $0x28] sm:$0xff]
    %v619 = vld [vmem:[#allocation2 + $0x30] sm:$0xff]
    %v620 = vld [vmem:[#allocation2 + $0x38] sm:$0xff]
    %v621 = vpack.c.bf16 %v615, %v615
    %622 = vmatprep.subr.bf16.mxu0 %v443
    %623 = vmatpush1.bf16.msra.mxu0 %v442
    %624 = vmatprep.subr.bf16.mxu0 %v447
    %625 = vmatpush1.bf16.msra.mxu0 %v446
    %626 = vmatprep.subr.bf16.mxu0 %v451
    %627 = vmatpush1.bf16.msra.mxu0 %v450
    %628 = vmatprep.subr.bf16.mxu0 %v455
    %629 = vmatpush1.bf16.msra.mxu0 %v454
    %630 = vmatprep.subr.bf16.mxu0 %v459
    %631 = vmatpush1.bf16.msra.mxu0 %v458
    %632 = vmatprep.subr.bf16.mxu0 %v463
    %633 = vmatpush1.bf16.msra.mxu0 %v462
    %634 = vmatprep.subr.bf16.mxu0 %v467
    %635 = vmatpush1.bf16.msra.mxu0 %v466
    %636 = vmatprep.subr.bf16.mxu0 %v471
    %637 = vmatpush1.bf16.msra.mxu0 %v470
    %638 = vmatprep.subr.bf16.mxu0 0
    %639 = vmatpush1.bf16.msra.mxu0 0
    %640 = vmatprep.subr.bf16.mxu0 0
    %641 = vmatpush1.bf16.msra.mxu0 0
    %642 = vmatprep.subr.bf16.mxu0 0
    %643 = vmatpush1.bf16.msra.mxu0 0
    %644 = vmatprep.subr.bf16.mxu0 0
    %645 = vmatpush1.bf16.msra.mxu0 0
    %646 = vmatprep.subr.bf16.mxu0 0
    %647 = vmatpush1.bf16.msra.mxu0 0
    %648 = vmatprep.subr.bf16.mxu0 0
    %649 = vmatpush1.bf16.msra.mxu0 0
    %650 = vmatprep.subr.bf16.mxu0 0
    %651 = vmatpush1.bf16.msra.mxu0 0
    %652 = vmatprep.subr.bf16.mxu0 0
    %653 = vmatpush1.bf16.msra.mxu0 0
    %654 = vmatprep.mubr.bf16.mxu0 0
    %655 = vmatmul.mubr.bf16.gmra.mrb[0].mxu0 %v621
    %v656 = vpop.f32.mrb[0].mxu0
    %v657 = vadd.f32 0.0, %v656
    %v658 = vpop.f32.mrb[0].mxu0
    %v659 = vadd.f32 0.0, %v658
    %v660 = vpop.f32.mrb[0].mxu0
    %v661 = vpop.f32.mrb[0].mxu0
    %662 = vdwg.mxu0
    %663 = vmatprep.subr.bf16.mxu0 %v445
    %664 = vmatpush1.bf16.msra.mxu0 %v444
    %665 = vmatprep.subr.bf16.mxu0 %v449
    %666 = vmatpush1.bf16.msra.mxu0 %v448
    %667 = vmatprep.subr.bf16.mxu0 %v453
    %668 = vmatpush1.bf16.msra.mxu0 %v452
    %669 = vmatprep.subr.bf16.mxu0 %v457
    %670 = vmatpush1.bf16.msra.mxu0 %v456
    %671 = vmatprep.subr.bf16.mxu0 %v461
    %672 = vmatpush1.bf16.msra.mxu0 %v460
    %673 = vmatprep.subr.bf16.mxu0 %v465
    %674 = vmatpush1.bf16.msra.mxu0 %v464
    %675 = vmatprep.subr.bf16.mxu0 %v469
    %676 = vmatpush1.bf16.msra.mxu0 %v468
    %677 = vmatprep.subr.bf16.mxu0 %v473
    %678 = vmatpush1.bf16.msra.mxu0 %v472
    %679 = vmatprep.subr.bf16.mxu0 0
    %680 = vmatpush1.bf16.msra.mxu0 0
    %681 = vmatprep.subr.bf16.mxu0 0
    %682 = vmatpush1.bf16.msra.mxu0 0
    %683 = vmatprep.subr.bf16.mxu0 0
    %684 = vmatpush1.bf16.msra.mxu0 0
    %685 = vmatprep.subr.bf16.mxu0 0
    %686 = vmatpush1.bf16.msra.mxu0 0
    %687 = vmatprep.subr.bf16.mxu0 0
    %688 = vmatpush1.bf16.msra.mxu0 0
    %689 = vmatprep.subr.bf16.mxu0 0
    %690 = vmatpush1.bf16.msra.mxu0 0
    %691 = vmatprep.subr.bf16.mxu0 0
    %692 = vmatpush1.bf16.msra.mxu0 0
    %693 = vmatprep.subr.bf16.mxu0 0
    %694 = vmatpush1.bf16.msra.mxu0 0
    %695 = vmatprep.mubr.bf16.mxu0 0
    %696 = vmatmul.mubr.bf16.gmra.mrb[0].mxu0 %v621
    %v697 = vpop.f32.mrb[0].mxu0
    %v698 = vadd.f32 0.0, %v697
    %v699 = vpop.f32.mrb[0].mxu0
    %v700 = vadd.f32 0.0, %v699
    %v701 = vpop.f32.mrb[0].mxu0
    %v702 = vpop.f32.mrb[0].mxu0
    %703 = vdwg.mxu0
    %v704 = vadd.f32 %v617, %v657
    %v705 = vadd.f32 %v618, %v659
    %v706 = vadd.f32 %v619, %v698
    %v707 = vadd.f32 %v620, %v700
    %v708 = vxor.u32 %v704, 2147483648
    %v709 = vxor.u32 %v705, 2147483648
    %v710 = vxor.u32 %v706, 2147483648
    %v711 = vmul.f32 %v708, 1.442695
    %v712 = vpow.pop %v711
    %v713 = vmul.f32 %v709, 1.442695
    %v714 = vpow.pop %v713
    %v715 = vmul.f32 %v710, 1.442695
    %v716 = vpow.pop %v715
    %v717 = vadd.f32 %v712, 1.0
    %v718 = vadd.f32 %v714, 1.0
    %v719 = vadd.f32 %v716, 1.0
    %v720 = vrcp.pop %v717
    %v721 = vmul.f32 1.0, %v720
    %v722 = vrcp.pop %v718
    %v723 = vmul.f32 1.0, %v722
    %v724 = vrcp.pop %v719
    %v725 = vmul.f32 1.0, %v724
    %v726 = vtanh.pop %v707
    %v727 = vmul.f32 %v723, %v613
    %v728 = vmul.f32 %v721, %v726
    %v729 = vadd.f32 %v727, %v728
    %v730 = vtanh.pop %v729
    %v731 = vmul.f32 %v725, %v730
    %732 = vst [vmem:[#allocation3 + $0x8] sm:$0xff] %v731
    %v733 = vld [vmem:[#allocation2 + $0x40] sm:$0xff]
    %v734 = vld [vmem:[#allocation2 + $0x48] sm:$0xff]
    %v735 = vld [vmem:[#allocation2 + $0x50] sm:$0xff]
    %v736 = vld [vmem:[#allocation2 + $0x58] sm:$0xff]
    %v737 = vpack.c.bf16 %v731, %v731
    %738 = vmatprep.subr.bf16.mxu0 %v443
    %739 = vmatpush1.bf16.msra.mxu0 %v442
    %740 = vmatprep.subr.bf16.mxu0 %v447
    %741 = vmatpush1.bf16.msra.mxu0 %v446
    %742 = vmatprep.subr.bf16.mxu0 %v451
    %743 = vmatpush1.bf16.msra.mxu0 %v450
    %744 = vmatprep.subr.bf16.mxu0 %v455
    %745 = vmatpush1.bf16.msra.mxu0 %v454
    %746 = vmatprep.subr.bf16.mxu0 %v459
    %747 = vmatpush1.bf16.msra.mxu0 %v458
    %748 = vmatprep.subr.bf16.mxu0 %v463
    %749 = vmatpush1.bf16.msra.mxu0 %v462
    %750 = vmatprep.subr.bf16.mxu0 %v467
    %751 = vmatpush1.bf16.msra.mxu0 %v466
    %752 = vmatprep.subr.bf16.mxu0 %v471
    %753 = vmatpush1.bf16.msra.mxu0 %v470
    %754 = vmatprep.subr.bf16.mxu0 0
    %755 = vmatpush1.bf16.msra.mxu0 0
    %756 = vmatprep.subr.bf16.mxu0 0
    %757 = vmatpush1.bf16.msra.mxu0 0
    %758 = vmatprep.subr.bf16.mxu0 0
    %759 = vmatpush1.bf16.msra.mxu0 0
    %760 = vmatprep.subr.bf16.mxu0 0
    %761 = vmatpush1.bf16.msra.mxu0 0
    %762 = vmatprep.subr.bf16.mxu0 0
    %763 = vmatpush1.bf16.msra.mxu0 0
    %764 = vmatprep.subr.bf16.mxu0 0
    %765 = vmatpush1.bf16.msra.mxu0 0
    %766 = vmatprep.subr.bf16.mxu0 0
    %767 = vmatpush1.bf16.msra.mxu0 0
    %768 = vmatprep.subr.bf16.mxu0 0
    %769 = vmatpush1.bf16.msra.mxu0 0
    %770 = vmatprep.mubr.bf16.mxu0 0
    %771 = vmatmul.mubr.bf16.gmra.mrb[0].mxu0 %v737
    %v772 = vpop.f32.mrb[0].mxu0
    %v773 = vadd.f32 0.0, %v772
    %v774 = vpop.f32.mrb[0].mxu0
    %v775 = vadd.f32 0.0, %v774
    %v776 = vpop.f32.mrb[0].mxu0
    %v777 = vpop.f32.mrb[0].mxu0
    %778 = vdwg.mxu0
    %779 = vmatprep.subr.bf16.mxu0 %v445
    %780 = vmatpush1.bf16.msra.mxu0 %v444
    %781 = vmatprep.subr.bf16.mxu0 %v449
    %782 = vmatpush1.bf16.msra.mxu0 %v448
    %783 = vmatprep.subr.bf16.mxu0 %v453
    %784 = vmatpush1.bf16.msra.mxu0 %v452
    %785 = vmatprep.subr.bf16.mxu0 %v457
    %786 = vmatpush1.bf16.msra.mxu0 %v456
    %787 = vmatprep.subr.bf16.mxu0 %v461
    %788 = vmatpush1.bf16.msra.mxu0 %v460
    %789 = vmatprep.subr.bf16.mxu0 %v465
    %790 = vmatpush1.bf16.msra.mxu0 %v464
    %791 = vmatprep.subr.bf16.mxu0 %v469
    %792 = vmatpush1.bf16.msra.mxu0 %v468
    %793 = vmatprep.subr.bf16.mxu0 %v473
    %794 = vmatpush1.bf16.msra.mxu0 %v472
    %795 = vmatprep.subr.bf16.mxu0 0
    %796 = vmatpush1.bf16.msra.mxu0 0
    %797 = vmatprep.subr.bf16.mxu0 0
    %798 = vmatpush1.bf16.msra.mxu0 0
    %799 = vmatprep.subr.bf16.mxu0 0
    %800 = vmatpush1.bf16.msra.mxu0 0
    %801 = vmatprep.subr.bf16.mxu0 0
    %802 = vmatpush1.bf16.msra.mxu0 0
    %803 = vmatprep.subr.bf16.mxu0 0
    %804 = vmatpush1.bf16.msra.mxu0 0
    %805 = vmatprep.subr.bf16.mxu0 0
    %806 = vmatpush1.bf16.msra.mxu0 0
    %807 = vmatprep.subr.bf16.mxu0 0
    %808 = vmatpush1.bf16.msra.mxu0 0
    %809 = vmatprep.subr.bf16.mxu0 0
    %810 = vmatpush1.bf16.msra.mxu0 0
    %811 = vmatprep.mubr.bf16.mxu0 0
    %812 = vmatmul.mubr.bf16.gmra.mrb[0].mxu0 %v737
    %v813 = vpop.f32.mrb[0].mxu0
    %v814 = vadd.f32 0.0, %v813
    %v815 = vpop.f32.mrb[0].mxu0
    %v816 = vadd.f32 0.0, %v815
    %v817 = vpop.f32.mrb[0].mxu0
    %v818 = vpop.f32.mrb[0].mxu0
    %819 = vdwg.mxu0
    %v820 = vadd.f32 %v733, %v773
    %v821 = vadd.f32 %v734, %v775
    %v822 = vadd.f32 %v735, %v814
    %v823 = vadd.f32 %v736, %v816
    %v824 = vxor.u32 %v820, 2147483648
    %v825 = vxor.u32 %v821, 2147483648
    %v826 = vxor.u32 %v822, 2147483648
    %v827 = vmul.f32 %v824, 1.442695
    %v828 = vpow.pop %v827
    %v829 = vmul.f32 %v825, 1.442695
    %v830 = vpow.pop %v829
    %v831 = vmul.f32 %v826, 1.442695
    %v832 = vpow.pop %v831
    %v833 = vadd.f32 %v828, 1.0
    %v834 = vadd.f32 %v830, 1.0
    %v835 = vadd.f32 %v832, 1.0
    %v836 = vrcp.pop %v833
    %v837 = vmul.f32 1.0, %v836
    %v838 = vrcp.pop %v834
    %v839 = vmul.f32 1.0, %v838
    %v840 = vrcp.pop %v835
    %v841 = vmul.f32 1.0, %v840
    %v842 = vtanh.pop %v823
    %v843 = vmul.f32 %v839, %v729
    %v844 = vmul.f32 %v837, %v842
    %v845 = vadd.f32 %v843, %v844
    %v846 = vtanh.pop %v845
    %v847 = vmul.f32 %v841, %v846
    %848 = vst [vmem:[#allocation3 + $0x10] sm:$0xff] %v847
    %v849 = vld [vmem:[#allocation2 + $0x60] sm:$0xff]
    %v850 = vld [vmem:[#allocation2 + $0x68] sm:$0xff]
    %v851 = vld [vmem:[#allocation2 + $0x70] sm:$0xff]
    %v852 = vld [vmem:[#allocation2 + $0x78] sm:$0xff]
    %v853 = vpack.c.bf16 %v847, %v847
    %854 = vmatprep.subr.bf16.mxu0 %v443
    %855 = vmatpush1.bf16.msra.mxu0 %v442
    %856 = vmatprep.subr.bf16.mxu0 %v447
    %857 = vmatpush1.bf16.msra.mxu0 %v446
    %858 = vmatprep.subr.bf16.mxu0 %v451
    %859 = vmatpush1.bf16.msra.mxu0 %v450
    %860 = vmatprep.subr.bf16.mxu0 %v455
    %861 = vmatpush1.bf16.msra.mxu0 %v454
    %862 = vmatprep.subr.bf16.mxu0 %v459
    %863 = vmatpush1.bf16.msra.mxu0 %v458
    %864 = vmatprep.subr.bf16.mxu0 %v463
    %865 = vmatpush1.bf16.msra.mxu0 %v462
    %866 = vmatprep.subr.bf16.mxu0 %v467
    %867 = vmatpush1.bf16.msra.mxu0 %v466
    %868 = vmatprep.subr.bf16.mxu0 %v471
    %869 = vmatpush1.bf16.msra.mxu0 %v470
    %870 = vmatprep.subr.bf16.mxu0 0
    %871 = vmatpush1.bf16.msra.mxu0 0
    %872 = vmatprep.subr.bf16.mxu0 0
    %873 = vmatpush1.bf16.msra.mxu0 0
    %874 = vmatprep.subr.bf16.mxu0 0
    %875 = vmatpush1.bf16.msra.mxu0 0
    %876 = vmatprep.subr.bf16.mxu0 0
    %877 = vmatpush1.bf16.msra.mxu0 0
    %878 = vmatprep.subr.bf16.mxu0 0
    %879 = vmatpush1.bf16.msra.mxu0 0
    %880 = vmatprep.subr.bf16.mxu0 0
    %881 = vmatpush1.bf16.msra.mxu0 0
    %882 = vmatprep.subr.bf16.mxu0 0
    %883 = vmatpush1.bf16.msra.mxu0 0
    %884 = vmatprep.subr.bf16.mxu0 0
    %885 = vmatpush1.bf16.msra.mxu0 0
    %886 = vmatprep.mubr.bf16.mxu0 0
    %887 = vmatmul.mubr.bf16.gmra.mrb[0].mxu0 %v853
    %v888 = vpop.f32.mrb[0].mxu0
    %v889 = vadd.f32 0.0, %v888
    %v890 = vpop.f32.mrb[0].mxu0
    %v891 = vadd.f32 0.0, %v890
    %v892 = vpop.f32.mrb[0].mxu0
    %v893 = vpop.f32.mrb[0].mxu0
    %894 = vdwg.mxu0
    %895 = vmatprep.subr.bf16.mxu0 %v445
    %896 = vmatpush1.bf16.msra.mxu0 %v444
    %897 = vmatprep.subr.bf16.mxu0 %v449
    %898 = vmatpush1.bf16.msra.mxu0 %v448
    %899 = vmatprep.subr.bf16.mxu0 %v453
    %900 = vmatpush1.bf16.msra.mxu0 %v452
    %901 = vmatprep.subr.bf16.mxu0 %v457
    %902 = vmatpush1.bf16.msra.mxu0 %v456
    %903 = vmatprep.subr.bf16.mxu0 %v461
    %904 = vmatpush1.bf16.msra.mxu0 %v460
    %905 = vmatprep.subr.bf16.mxu0 %v465
    %906 = vmatpush1.bf16.msra.mxu0 %v464
    %907 = vmatprep.subr.bf16.mxu0 %v469
    %908 = vmatpush1.bf16.msra.mxu0 %v468
    %909 = vmatprep.subr.bf16.mxu0 %v473
    %910 = vmatpush1.bf16.msra.mxu0 %v472
    %911 = vmatprep.subr.bf16.mxu0 0
    %912 = vmatpush1.bf16.msra.mxu0 0
    %913 = vmatprep.subr.bf16.mxu0 0
    %914 = vmatpush1.bf16.msra.mxu0 0
    %915 = vmatprep.subr.bf16.mxu0 0
    %916 = vmatpush1.bf16.msra.mxu0 0
    %917 = vmatprep.subr.bf16.mxu0 0
    %918 = vmatpush1.bf16.msra.mxu0 0
    %919 = vmatprep.subr.bf16.mxu0 0
    %920 = vmatpush1.bf16.msra.mxu0 0
    %921 = vmatprep.subr.bf16.mxu0 0
    %922 = vmatpush1.bf16.msra.mxu0 0
    %923 = vmatprep.subr.bf16.mxu0 0
    %924 = vmatpush1.bf16.msra.mxu0 0
    %925 = vmatprep.subr.bf16.mxu0 0
    %926 = vmatpush1.bf16.msra.mxu0 0
    %927 = vmatprep.mubr.bf16.mxu0 0
    %928 = vmatmul.mubr.bf16.gmra.mrb[0].mxu0 %v853
    %v929 = vpop.f32.mrb[0].mxu0
    %v930 = vadd.f32 0.0, %v929
    %v931 = vpop.f32.mrb[0].mxu0
    %v932 = vadd.f32 0.0, %v931
    %v933 = vpop.f32.mrb[0].mxu0
    %v934 = vpop.f32.mrb[0].mxu0
    %935 = vdwg.mxu0
    %v936 = vadd.f32 %v849, %v889
    %v937 = vadd.f32 %v850, %v891
    %v938 = vadd.f32 %v851, %v930
    %v939 = vadd.f32 %v852, %v932
    %v940 = vxor.u32 %v936, 2147483648
    %v941 = vxor.u32 %v937, 2147483648
    %v942 = vxor.u32 %v938, 2147483648
    %v943 = vmul.f32 %v940, 1.442695
    %v944 = vpow.pop %v943
    %v945 = vmul.f32 %v941, 1.442695
    %v946 = vpow.pop %v945
    %v947 = vmul.f32 %v942, 1.442695
    %v948 = vpow.pop %v947
    %v949 = vadd.f32 %v944, 1.0
    %v950 = vadd.f32 %v946, 1.0
    %v951 = vadd.f32 %v948, 1.0
    %v952 = vrcp.pop %v949
    %v953 = vmul.f32 1.0, %v952
    %v954 = vrcp.pop %v950
    %v955 = vmul.f32 1.0, %v954
    %v956 = vrcp.pop %v951
    %v957 = vmul.f32 1.0, %v956
    %v958 = vtanh.pop %v939
    %v959 = vmul.f32 %v955, %v845
    %v960 = vmul.f32 %v953, %v958
    %v961 = vadd.f32 %v959, %v960
    %v962 = vtanh.pop %v961
    %v963 = vmul.f32 %v957, %v962
    %964 = vst [vmem:[#allocation3 + $0x18] sm:$0xff] %v963
    %v965 = vld [vmem:[#allocation2 + $0x80] sm:$0xff]
    %v966 = vld [vmem:[#allocation2 + $0x88] sm:$0xff]
    %v967 = vld [vmem:[#allocation2 + $0x90] sm:$0xff]
    %v968 = vld [vmem:[#allocation2 + $0x98] sm:$0xff]
    %v969 = vpack.c.bf16 %v963, %v963
    %970 = vmatprep.subr.bf16.mxu0 %v443
    %971 = vmatpush1.bf16.msra.mxu0 %v442
    %972 = vmatprep.subr.bf16.mxu0 %v447
    %973 = vmatpush1.bf16.msra.mxu0 %v446
    %974 = vmatprep.subr.bf16.mxu0 %v451
    %975 = vmatpush1.bf16.msra.mxu0 %v450
    %976 = vmatprep.subr.bf16.mxu0 %v455
    %977 = vmatpush1.bf16.msra.mxu0 %v454
    %978 = vmatprep.subr.bf16.mxu0 %v459
    %979 = vmatpush1.bf16.msra.mxu0 %v458
    %980 = vmatprep.subr.bf16.mxu0 %v463
    %981 = vmatpush1.bf16.msra.mxu0 %v462
    %982 = vmatprep.subr.bf16.mxu0 %v467
    %983 = vmatpush1.bf16.msra.mxu0 %v466
    %984 = vmatprep.subr.bf16.mxu0 %v471
    %985 = vmatpush1.bf16.msra.mxu0 %v470
    %986 = vmatprep.subr.bf16.mxu0 0
    %987 = vmatpush1.bf16.msra.mxu0 0
    %988 = vmatprep.subr.bf16.mxu0 0
    %989 = vmatpush1.bf16.msra.mxu0 0
    %990 = vmatprep.subr.bf16.mxu0 0
    %991 = vmatpush1.bf16.msra.mxu0 0
    %992 = vmatprep.subr.bf16.mxu0 0
    %993 = vmatpush1.bf16.msra.mxu0 0
    %994 = vmatprep.subr.bf16.mxu0 0
    %995 = vmatpush1.bf16.msra.mxu0 0
    %996 = vmatprep.subr.bf16.mxu0 0
    %997 = vmatpush1.bf16.msra.mxu0 0
    %998 = vmatprep.subr.bf16.mxu0 0
    %999 = vmatpush1.bf16.msra.mxu0 0
    %1000 = vmatprep.subr.bf16.mxu0 0
    %1001 = vmatpush1.bf16.msra.mxu0 0
    %1002 = vmatprep.mubr.bf16.mxu0 0
    %1003 = vmatmul.mubr.bf16.gmra.mrb[0].mxu0 %v969
    %v1004 = vpop.f32.mrb[0].mxu0
    %v1005 = vadd.f32 0.0, %v1004
    %v1006 = vpop.f32.mrb[0].mxu0
    %v1007 = vadd.f32 0.0, %v1006
    %v1008 = vpop.f32.mrb[0].mxu0
    %v1009 = vpop.f32.mrb[0].mxu0
    %1010 = vdwg.mxu0
    %1011 = vmatprep.subr.bf16.mxu0 %v445
    %1012 = vmatpush1.bf16.msra.mxu0 %v444
    %1013 = vmatprep.subr.bf16.mxu0 %v449
    %1014 = vmatpush1.bf16.msra.mxu0 %v448
    %1015 = vmatprep.subr.bf16.mxu0 %v453
    %1016 = vmatpush1.bf16.msra.mxu0 %v452
    %1017 = vmatprep.subr.bf16.mxu0 %v457
    %1018 = vmatpush1.bf16.msra.mxu0 %v456
    %1019 = vmatprep.subr.bf16.mxu0 %v461
    %1020 = vmatpush1.bf16.msra.mxu0 %v460
    %1021 = vmatprep.subr.bf16.mxu0 %v465
    %1022 = vmatpush1.bf16.msra.mxu0 %v464
    %1023 = vmatprep.subr.bf16.mxu0 %v469
    %1024 = vmatpush1.bf16.msra.mxu0 %v468
    %1025 = vmatprep.subr.bf16.mxu0 %v473
    %1026 = vmatpush1.bf16.msra.mxu0 %v472
    %1027 = vmatprep.subr.bf16.mxu0 0
    %1028 = vmatpush1.bf16.msra.mxu0 0
    %1029 = vmatprep.subr.bf16.mxu0 0
    %1030 = vmatpush1.bf16.msra.mxu0 0
    %1031 = vmatprep.subr.bf16.mxu0 0
    %1032 = vmatpush1.bf16.msra.mxu0 0
    %1033 = vmatprep.subr.bf16.mxu0 0
    %1034 = vmatpush1.bf16.msra.mxu0 0
    %1035 = vmatprep.subr.bf16.mxu0 0
    %1036 = vmatpush1.bf16.msra.mxu0 0
    %1037 = vmatprep.subr.bf16.mxu0 0
    %1038 = vmatpush1.bf16.msra.mxu0 0
    %1039 = vmatprep.subr.bf16.mxu0 0
    %1040 = vmatpush1.bf16.msra.mxu0 0
    %1041 = vmatprep.subr.bf16.mxu0 0
    %1042 = vmatpush1.bf16.msra.mxu0 0
    %1043 = vmatprep.mubr.bf16.mxu0 0
    %1044 = vmatmul.mubr.bf16.gmra.mrb[0].mxu0 %v969
    %v1045 = vpop.f32.mrb[0].mxu0
    %v1046 = vadd.f32 0.0, %v1045
    %v1047 = vpop.f32.mrb[0].mxu0
    %v1048 = vadd.f32 0.0, %v1047
    %v1049 = vpop.f32.mrb[0].mxu0
    %v1050 = vpop.f32.mrb[0].mxu0
    %1051 = vdwg.mxu0
    %v1052 = vadd.f32 %v965, %v1005
    %v1053 = vadd.f32 %v966, %v1007
    %v1054 = vadd.f32 %v967, %v1046
    %v1055 = vadd.f32 %v968, %v1048
    %v1056 = vxor.u32 %v1052, 2147483648
    %v1057 = vxor.u32 %v1053, 2147483648
    %v1058 = vxor.u32 %v1054, 2147483648
    %v1059 = vmul.f32 %v1056, 1.442695
    %v1060 = vpow.pop %v1059
    %v1061 = vmul.f32 %v1057, 1.442695
    %v1062 = vpow.pop %v1061
    %v1063 = vmul.f32 %v1058, 1.442695
    %v1064 = vpow.pop %v1063
    %v1065 = vadd.f32 %v1060, 1.0
    %v1066 = vadd.f32 %v1062, 1.0
    %v1067 = vadd.f32 %v1064, 1.0
    %v1068 = vrcp.pop %v1065
    %v1069 = vmul.f32 1.0, %v1068
    %v1070 = vrcp.pop %v1066
    %v1071 = vmul.f32 1.0, %v1070
    %v1072 = vrcp.pop %v1067
    %v1073 = vmul.f32 1.0, %v1072
    %v1074 = vtanh.pop %v1055
    %v1075 = vmul.f32 %v1071, %v961
    %v1076 = vmul.f32 %v1069, %v1074
    %v1077 = vadd.f32 %v1075, %v1076
    %v1078 = vtanh.pop %v1077
    %v1079 = vmul.f32 %v1073, %v1078
    %1080 = vst [vmem:[#allocation3 + $0x20] sm:$0xff] %v1079
    %v1081 = vld [vmem:[#allocation3] sm:$0xff]
    %v1082 = vld [vmem:[#allocation3 + $0x8] sm:$0xff]
    %v1083 = vld [vmem:[#allocation3 + $0x10] sm:$0xff]
    %v1084 = vld [vmem:[#allocation3 + $0x18] sm:$0xff]
    %v1085 = vld [vmem:[#allocation3 + $0x20] sm:$0xff]
    %v1086 = vpack.c.bf16 %v1082, %v1081
    %v1087 = vpack.c.bf16 %v1084, %v1083
    %v1088 = vpack.c.bf16 %v1085, %v1085
    %v1089 = vld [vmem:[#allocation6] sm:$0xff]
    %v1090 = vld [vmem:[#allocation6 + $0x8] sm:$0xff]
    %v1091 = vld [vmem:[#allocation6 + $0x10] sm:$0xff]
    %v1092 = vld [vmem:[#allocation6 + $0x18] sm:$0xff]
    %v1093 = vld [vmem:[#allocation6 + $0x20] sm:$0xff]
    %v1094 = vld [vmem:[#allocation6 + $0x28] sm:$0xff]
    %v1095 = vld [vmem:[#allocation6 + $0x30] sm:$0xff]
    %v1096 = vld [vmem:[#allocation6 + $0x38] sm:$0xff]
    %v1097 = vld [vmem:[#allocation6 + $0x40] sm:$0xff]
    %v1098 = vld [vmem:[#allocation6 + $0x48] sm:$0xff]
    %v1099 = vld [vmem:[#allocation6 + $0x50] sm:$0xff]
    %v1100 = vld [vmem:[#allocation6 + $0x58] sm:$0xff]
    %v1101 = vld [vmem:[#allocation6 + $0x60] sm:$0xff]
    %v1102 = vld [vmem:[#allocation6 + $0x68] sm:$0xff]
    %v1103 = vld [vmem:[#allocation6 + $0x70] sm:$0xff]
    %v1104 = vld [vmem:[#allocation6 + $0x78] sm:$0xff]
    %v1105 = vld [vmem:[#allocation6 + $0x80] sm:$0xff]
    %v1106 = vld [vmem:[#allocation6 + $0x88] sm:$0xff]
    %v1107 = vld [vmem:[#allocation6 + $0x90] sm:$0xff]
    %v1108 = vld [vmem:[#allocation6 + $0x98] sm:$0xff]
    %v1109 = vld [vmem:[#allocation6 + $0xa0] sm:$0xff]
    %v1110 = vld [vmem:[#allocation6 + $0xa8] sm:$0xff]
    %v1111 = vld [vmem:[#allocation6 + $0xb0] sm:$0xff]
    %v1112 = vld [vmem:[#allocation6 + $0xb8] sm:$0xff]
    %v1113 = vld [vmem:[#allocation6 + $0xc0] sm:$0xff]
    %v1114 = vld [vmem:[#allocation6 + $0xc8] sm:$0xff]
    %v1115 = vld [vmem:[#allocation6 + $0xd0] sm:$0xff]
    %v1116 = vld [vmem:[#allocation6 + $0xd8] sm:$0xff]
    %v1117 = vld [vmem:[#allocation6 + $0xe0] sm:$0xff]
    %v1118 = vld [vmem:[#allocation6 + $0xe8] sm:$0xff]
    %v1119 = vld [vmem:[#allocation6 + $0xf0] sm:$0xff]
    %v1120 = vld [vmem:[#allocation6 + $0xf8] sm:$0xff]
    %v1121 = vld [vmem:[#allocation9] sm:$0xf]
    %v1123 = vlaneseq
    %v1124 = vshrl.u32 %v1123, 7
    %v1125 = vsub.s32 0, %v1124
    %v1126 = vrot.slane %v1121, %v1125
    %v1127 = vlaneseq
    %v1128 = vshrl.u32 %v1127, 7
    %v1129 = vsub.s32 1, %v1128
    %v1130 = vrot.slane %v1121, %v1129
    %v1131 = vlaneseq
    %v1132 = vshrl.u32 %v1131, 7
    %v1133 = vsub.s32 2, %v1132
    %v1134 = vrot.slane %v1121, %v1133
    %v1135 = vlaneseq
    %v1136 = vshrl.u32 %v1135, 7
    %v1137 = vsub.s32 3, %v1136
    %v1138 = vrot.slane %v1121, %v1137
    %v1175 = vunpack.c.l.b16 %v1089
    %v1176 = vunpack.c.h.b16 %v1089
    %v1177 = vunpack.c.l.b16 %v1090
    %v1178 = vunpack.c.h.b16 %v1090
    %v1179 = vunpack.c.l.b16 %v1091
    %v1180 = vunpack.c.h.b16 %v1091
    %v1181 = vunpack.c.l.b16 %v1092
    %v1182 = vunpack.c.h.b16 %v1092
    %v1183 = vunpack.c.l.b16 %v1093
    %v1184 = vunpack.c.h.b16 %v1093
    %v1185 = vunpack.c.l.b16 %v1094
    %v1186 = vunpack.c.h.b16 %v1094
    %v1187 = vunpack.c.l.b16 %v1095
    %v1188 = vunpack.c.h.b16 %v1095
    %v1189 = vunpack.c.l.b16 %v1096
    %v1190 = vunpack.c.h.b16 %v1096
    %v1191 = vunpack.c.l.b16 %v1097
    %v1192 = vunpack.c.h.b16 %v1097
    %v1193 = vunpack.c.l.b16 %v1098
    %v1194 = vunpack.c.h.b16 %v1098
    %v1195 = vunpack.c.l.b16 %v1099
    %v1196 = vunpack.c.h.b16 %v1099
    %v1197 = vunpack.c.l.b16 %v1100
    %v1198 = vunpack.c.h.b16 %v1100
    %v1199 = vunpack.c.l.b16 %v1101
    %v1200 = vunpack.c.h.b16 %v1101
    %v1201 = vunpack.c.l.b16 %v1102
    %v1202 = vunpack.c.h.b16 %v1102
    %v1203 = vunpack.c.l.b16 %v1103
    %v1204 = vunpack.c.h.b16 %v1103
    %v1205 = vunpack.c.l.b16 %v1104
    %v1206 = vunpack.c.h.b16 %v1104
    %v1207 = vunpack.c.l.b16 %v1105
    %v1208 = vunpack.c.h.b16 %v1105
    %v1209 = vunpack.c.l.b16 %v1106
    %v1210 = vunpack.c.h.b16 %v1106
    %v1211 = vunpack.c.l.b16 %v1107
    %v1212 = vunpack.c.h.b16 %v1107
    %v1213 = vunpack.c.l.b16 %v1108
    %v1214 = vunpack.c.h.b16 %v1108
    %v1215 = vunpack.c.l.b16 %v1109
    %v1216 = vunpack.c.h.b16 %v1109
    %v1217 = vunpack.c.l.b16 %v1110
    %v1218 = vunpack.c.h.b16 %v1110
    %v1219 = vunpack.c.l.b16 %v1111
    %v1220 = vunpack.c.h.b16 %v1111
    %v1221 = vunpack.c.l.b16 %v1112
    %v1222 = vunpack.c.h.b16 %v1112
    %v1223 = vunpack.c.l.b16 %v1113
    %v1224 = vunpack.c.h.b16 %v1113
    %v1225 = vunpack.c.l.b16 %v1114
    %v1226 = vunpack.c.h.b16 %v1114
    %v1227 = vunpack.c.l.b16 %v1115
    %v1228 = vunpack.c.h.b16 %v1115
    %v1229 = vunpack.c.l.b16 %v1116
    %v1230 = vunpack.c.h.b16 %v1116
    %v1231 = vunpack.c.l.b16 %v1117
    %v1232 = vunpack.c.h.b16 %v1117
    %v1233 = vunpack.c.l.b16 %v1118
    %v1234 = vunpack.c.h.b16 %v1118
    %v1235 = vunpack.c.l.b16 %v1119
    %v1236 = vunpack.c.h.b16 %v1119
    %v1237 = vunpack.c.l.b16 %v1120
    %v1238 = vunpack.c.h.b16 %v1120
    %v1239 = vpack.c.b16 %v1179, %v1175
    %v1240 = vpack.c.b16 %v1180, %v1176
    %v1241 = vpack.c.b16 %v1181, %v1177
    %v1242 = vpack.c.b16 %v1182, %v1178
    %v1243 = vpack.c.b16 %v1187, %v1183
    %v1244 = vpack.c.b16 %v1188, %v1184
    %v1245 = vpack.c.b16 %v1189, %v1185
    %v1246 = vpack.c.b16 %v1190, %v1186
    %v1247 = vpack.c.b16 %v1195, %v1191
    %v1248 = vpack.c.b16 %v1196, %v1192
    %v1249 = vpack.c.b16 %v1197, %v1193
    %v1250 = vpack.c.b16 %v1198, %v1194
    %v1251 = vpack.c.b16 %v1203, %v1199
    %v1252 = vpack.c.b16 %v1204, %v1200
    %v1253 = vpack.c.b16 %v1205, %v1201
    %v1254 = vpack.c.b16 %v1206, %v1202
    %v1255 = vpack.c.b16 %v1211, %v1207
    %v1256 = vpack.c.b16 %v1212, %v1208
    %v1257 = vpack.c.b16 %v1213, %v1209
    %v1258 = vpack.c.b16 %v1214, %v1210
    %v1259 = vpack.c.b16 %v1219, %v1215
    %v1260 = vpack.c.b16 %v1220, %v1216
    %v1261 = vpack.c.b16 %v1221, %v1217
    %v1262 = vpack.c.b16 %v1222, %v1218
    %v1263 = vpack.c.b16 %v1227, %v1223
    %v1264 = vpack.c.b16 %v1228, %v1224
    %v1265 = vpack.c.b16 %v1229, %v1225
    %v1266 = vpack.c.b16 %v1230, %v1226
    %v1267 = vpack.c.b16 %v1235, %v1231
    %v1268 = vpack.c.b16 %v1236, %v1232
    %v1269 = vpack.c.b16 %v1237, %v1233
    %v1270 = vpack.c.b16 %v1238, %v1234
    %1303 = vmatprep.subr.bf16.mxu0 %v1240
    %1304 = vmatpush1.bf16.msra.mxu0 %v1239
    %1305 = vmatprep.subr.bf16.mxu0 %v1244
    %1306 = vmatpush1.bf16.msra.mxu0 %v1243
    %1307 = vmatprep.subr.bf16.mxu0 %v1248
    %1308 = vmatpush1.bf16.msra.mxu0 %v1247
    %1309 = vmatprep.subr.bf16.mxu0 %v1252
    %1310 = vmatpush1.bf16.msra.mxu0 %v1251
    %1311 = vmatprep.subr.bf16.mxu0 %v1256
    %1312 = vmatpush1.bf16.msra.mxu0 %v1255
    %1313 = vmatprep.subr.bf16.mxu0 %v1260
    %1314 = vmatpush1.bf16.msra.mxu0 %v1259
    %1315 = vmatprep.subr.bf16.mxu0 %v1264
    %1316 = vmatpush1.bf16.msra.mxu0 %v1263
    %1317 = vmatprep.subr.bf16.mxu0 %v1268
    %1318 = vmatpush1.bf16.msra.mxu0 %v1267
    %1319 = vmatprep.subr.bf16.mxu0 0
    %1320 = vmatpush1.bf16.msra.mxu0 0
    %1321 = vmatprep.subr.bf16.mxu0 0
    %1322 = vmatpush1.bf16.msra.mxu0 0
    %1323 = vmatprep.subr.bf16.mxu0 0
    %1324 = vmatpush1.bf16.msra.mxu0 0
    %1325 = vmatprep.subr.bf16.mxu0 0
    %1326 = vmatpush1.bf16.msra.mxu0 0
    %1327 = vmatprep.subr.bf16.mxu0 0
    %1328 = vmatpush1.bf16.msra.mxu0 0
    %1329 = vmatprep.subr.bf16.mxu0 0
    %1330 = vmatpush1.bf16.msra.mxu0 0
    %1331 = vmatprep.subr.bf16.mxu0 0
    %1332 = vmatpush1.bf16.msra.mxu0 0
    %1333 = vmatprep.subr.bf16.mxu0 0
    %1334 = vmatpush1.bf16.msra.mxu0 0
    %1335 = vmatprep.mubr.bf16.mxu0 0
    %1336 = vmatmul.mubr.bf16.gmra.mrb[0].mxu0 %v1086
    %v1337 = vpop.f32.mrb[0].mxu0
    %v1338 = vadd.f32 %v1126, %v1337
    %v1339 = vpop.f32.mrb[0].mxu0
    %v1340 = vadd.f32 %v1130, %v1339
    %v1341 = vpop.f32.mrb[0].mxu0
    %v1342 = vadd.f32 %v1126, %v1341
    %v1343 = vpop.f32.mrb[0].mxu0
    %v1344 = vadd.f32 %v1130, %v1343
    %1345 = vmatprep.mubr.bf16.mxu0 0
    %1346 = vmatmul.mubr.bf16.gmra.mrb[0].mxu0 %v1087
    %v1347 = vpop.f32.mrb[0].mxu0
    %v1348 = vadd.f32 %v1126, %v1347
    %v1349 = vpop.f32.mrb[0].mxu0
    %v1350 = vadd.f32 %v1130, %v1349
    %v1351 = vpop.f32.mrb[0].mxu0
    %v1352 = vadd.f32 %v1126, %v1351
    %v1353 = vpop.f32.mrb[0].mxu0
    %v1354 = vadd.f32 %v1130, %v1353
    %1355 = vmatprep.mubr.bf16.mxu0 0
    %1356 = vmatmul.mubr.bf16.gmra.mrb[0].mxu0 %v1088
    %v1357 = vpop.f32.mrb[0].mxu0
    %v1358 = vadd.f32 %v1126, %v1357
    %v1359 = vpop.f32.mrb[0].mxu0
    %v1360 = vadd.f32 %v1130, %v1359
    %v1361 = vpop.f32.mrb[0].mxu0
    %v1362 = vpop.f32.mrb[0].mxu0
    %1363 = vdwg.mxu0
    %1364 = vmatprep.subr.bf16.mxu0 %v1242
    %1365 = vmatpush1.bf16.msra.mxu0 %v1241
    %1366 = vmatprep.subr.bf16.mxu0 %v1246
    %1367 = vmatpush1.bf16.msra.mxu0 %v1245
    %1368 = vmatprep.subr.bf16.mxu0 %v1250
    %1369 = vmatpush1.bf16.msra.mxu0 %v1249
    %1370 = vmatprep.subr.bf16.mxu0 %v1254
    %1371 = vmatpush1.bf16.msra.mxu0 %v1253
    %1372 = vmatprep.subr.bf16.mxu0 %v1258
    %1373 = vmatpush1.bf16.msra.mxu0 %v1257
    %1374 = vmatprep.subr.bf16.mxu0 %v1262
    %1375 = vmatpush1.bf16.msra.mxu0 %v1261
    %1376 = vmatprep.subr.bf16.mxu0 %v1266
    %1377 = vmatpush1.bf16.msra.mxu0 %v1265
    %1378 = vmatprep.subr.bf16.mxu0 %v1270
    %1379 = vmatpush1.bf16.msra.mxu0 %v1269
    %1380 = vmatprep.subr.bf16.mxu0 0
    %1381 = vmatpush1.bf16.msra.mxu0 0
    %1382 = vmatprep.subr.bf16.mxu0 0
    %1383 = vmatpush1.bf16.msra.mxu0 0
    %1384 = vmatprep.subr.bf16.mxu0 0
    %1385 = vmatpush1.bf16.msra.mxu0 0
    %1386 = vmatprep.subr.bf16.mxu0 0
    %1387 = vmatpush1.bf16.msra.mxu0 0
    %1388 = vmatprep.subr.bf16.mxu0 0
    %1389 = vmatpush1.bf16.msra.mxu0 0
    %1390 = vmatprep.subr.bf16.mxu0 0
    %1391 = vmatpush1.bf16.msra.mxu0 0
    %1392 = vmatprep.subr.bf16.mxu0 0
    %1393 = vmatpush1.bf16.msra.mxu0 0
    %1394 = vmatprep.subr.bf16.mxu0 0
    %1395 = vmatpush1.bf16.msra.mxu0 0
    %1396 = vmatprep.mubr.bf16.mxu0 0
    %1397 = vmatmul.mubr.bf16.gmra.mrb[0].mxu0 %v1086
    %v1398 = vpop.f32.mrb[0].mxu0
    %v1399 = vadd.f32 %v1134, %v1398
    %v1400 = vpop.f32.mrb[0].mxu0
    %v1401 = vadd.f32 %v1138, %v1400
    %v1402 = vpop.f32.mrb[0].mxu0
    %v1403 = vadd.f32 %v1134, %v1402
    %v1404 = vpop.f32.mrb[0].mxu0
    %v1405 = vadd.f32 %v1138, %v1404
    %1406 = vmatprep.mubr.bf16.mxu0 0
    %1407 = vmatmul.mubr.bf16.gmra.mrb[0].mxu0 %v1087
    %v1408 = vpop.f32.mrb[0].mxu0
    %v1409 = vadd.f32 %v1134, %v1408
    %v1410 = vpop.f32.mrb[0].mxu0
    %v1411 = vadd.f32 %v1138, %v1410
    %v1412 = vpop.f32.mrb[0].mxu0
    %v1413 = vadd.f32 %v1134, %v1412
    %v1414 = vpop.f32.mrb[0].mxu0
    %v1415 = vadd.f32 %v1138, %v1414
    %1416 = vmatprep.mubr.bf16.mxu0 0
    %1417 = vmatmul.mubr.bf16.gmra.mrb[0].mxu0 %v1088
    %v1418 = vpop.f32.mrb[0].mxu0
    %v1419 = vadd.f32 %v1134, %v1418
    %v1420 = vpop.f32.mrb[0].mxu0
    %v1421 = vadd.f32 %v1138, %v1420
    %v1422 = vpop.f32.mrb[0].mxu0
    %v1423 = vpop.f32.mrb[0].mxu0
    %1424 = vdwg.mxu0
    %1425 = vst [vmem:[#allocation2] sm:$0xff] %v1338
    %1426 = vst [vmem:[#allocation2 + $0x8] sm:$0xff] %v1340
    %1427 = vst [vmem:[#allocation2 + $0x10] sm:$0xff] %v1399
    %1428 = vst [vmem:[#allocation2 + $0x18] sm:$0xff] %v1401
    %1429 = vst [vmem:[#allocation2 + $0x20] sm:$0xff] %v1342
    %1430 = vst [vmem:[#allocation2 + $0x28] sm:$0xff] %v1344
    %1431 = vst [vmem:[#allocation2 + $0x30] sm:$0xff] %v1403
    %1432 = vst [vmem:[#allocation2 + $0x38] sm:$0xff] %v1405
    %1433 = vst [vmem:[#allocation2 + $0x40] sm:$0xff] %v1348
    %1434 = vst [vmem:[#allocation2 + $0x48] sm:$0xff] %v1350
    %1435 = vst [vmem:[#allocation2 + $0x50] sm:$0xff] %v1409
    %1436 = vst [vmem:[#allocation2 + $0x58] sm:$0xff] %v1411
    %1437 = vst [vmem:[#allocation2 + $0x60] sm:$0xff] %v1352
    %1438 = vst [vmem:[#allocation2 + $0x68] sm:$0xff] %v1354
    %1439 = vst [vmem:[#allocation2 + $0x70] sm:$0xff] %v1413
    %1440 = vst [vmem:[#allocation2 + $0x78] sm:$0xff] %v1415
    %1441 = vst [vmem:[#allocation2 + $0x80] sm:$0xff] %v1358
    %1442 = vst [vmem:[#allocation2 + $0x88] sm:$0xff] %v1360
    %1443 = vst [vmem:[#allocation2 + $0x90] sm:$0xff] %v1419
    %1444 = vst [vmem:[#allocation2 + $0x98] sm:$0xff] %v1421
    %v1445 = vld [vmem:[#allocation8] sm:$0xff]
    %v1446 = vld [vmem:[#allocation8 + $0x8] sm:$0xff]
    %v1447 = vld [vmem:[#allocation8 + $0x10] sm:$0xff]
    %v1448 = vld [vmem:[#allocation8 + $0x18] sm:$0xff]
    %v1449 = vld [vmem:[#allocation8 + $0x20] sm:$0xff]
    %v1450 = vld [vmem:[#allocation8 + $0x28] sm:$0xff]
    %v1451 = vld [vmem:[#allocation8 + $0x30] sm:$0xff]
    %v1452 = vld [vmem:[#allocation8 + $0x38] sm:$0xff]
    %v1453 = vld [vmem:[#allocation8 + $0x40] sm:$0xff]
    %v1454 = vld [vmem:[#allocation8 + $0x48] sm:$0xff]
    %v1455 = vld [vmem:[#allocation8 + $0x50] sm:$0xff]
    %v1456 = vld [vmem:[#allocation8 + $0x58] sm:$0xff]
    %v1457 = vld [vmem:[#allocation8 + $0x60] sm:$0xff]
    %v1458 = vld [vmem:[#allocation8 + $0x68] sm:$0xff]
    %v1459 = vld [vmem:[#allocation8 + $0x70] sm:$0xff]
    %v1460 = vld [vmem:[#allocation8 + $0x78] sm:$0xff]
    %v1461 = vld [vmem:[#allocation8 + $0x80] sm:$0xff]
    %v1462 = vld [vmem:[#allocation8 + $0x88] sm:$0xff]
    %v1463 = vld [vmem:[#allocation8 + $0x90] sm:$0xff]
    %v1464 = vld [vmem:[#allocation8 + $0x98] sm:$0xff]
    %v1465 = vld [vmem:[#allocation8 + $0xa0] sm:$0xff]
    %v1466 = vld [vmem:[#allocation8 + $0xa8] sm:$0xff]
    %v1467 = vld [vmem:[#allocation8 + $0xb0] sm:$0xff]
    %v1468 = vld [vmem:[#allocation8 + $0xb8] sm:$0xff]
    %v1469 = vld [vmem:[#allocation8 + $0xc0] sm:$0xff]
    %v1470 = vld [vmem:[#allocation8 + $0xc8] sm:$0xff]
    %v1471 = vld [vmem:[#allocation8 + $0xd0] sm:$0xff]
    %v1472 = vld [vmem:[#allocation8 + $0xd8] sm:$0xff]
    %v1473 = vld [vmem:[#allocation8 + $0xe0] sm:$0xff]
    %v1474 = vld [vmem:[#allocation8 + $0xe8] sm:$0xff]
    %v1475 = vld [vmem:[#allocation8 + $0xf0] sm:$0xff]
    %v1476 = vld [vmem:[#allocation8 + $0xf8] sm:$0xff]
    %v1477 = vld [vmem:[#allocation2] sm:$0xff]
    %v1478 = vld [vmem:[#allocation2 + $0x8] sm:$0xff]
    %v1479 = vld [vmem:[#allocation2 + $0x10] sm:$0xff]
    %v1480 = vld [vmem:[#allocation2 + $0x18] sm:$0xff]
    %v1513 = vunpack.c.l.b16 %v1445
    %v1514 = vunpack.c.h.b16 %v1445
    %v1515 = vunpack.c.l.b16 %v1446
    %v1516 = vunpack.c.h.b16 %v1446
    %v1517 = vunpack.c.l.b16 %v1447
    %v1518 = vunpack.c.h.b16 %v1447
    %v1519 = vunpack.c.l.b16 %v1448
    %v1520 = vunpack.c.h.b16 %v1448
    %v1521 = vunpack.c.l.b16 %v1449
    %v1522 = vunpack.c.h.b16 %v1449
    %v1523 = vunpack.c.l.b16 %v1450
    %v1524 = vunpack.c.h.b16 %v1450
    %v1525 = vunpack.c.l.b16 %v1451
    %v1526 = vunpack.c.h.b16 %v1451
    %v1527 = vunpack.c.l.b16 %v1452
    %v1528 = vunpack.c.h.b16 %v1452
    %v1529 = vunpack.c.l.b16 %v1453
    %v1530 = vunpack.c.h.b16 %v1453
    %v1531 = vunpack.c.l.b16 %v1454
    %v1532 = vunpack.c.h.b16 %v1454
    %v1533 = vunpack.c.l.b16 %v1455
    %v1534 = vunpack.c.h.b16 %v1455
    %v1535 = vunpack.c.l.b16 %v1456
    %v1536 = vunpack.c.h.b16 %v1456
    %v1537 = vunpack.c.l.b16 %v1457
    %v1538 = vunpack.c.h.b16 %v1457
    %v1539 = vunpack.c.l.b16 %v1458
    %v1540 = vunpack.c.h.b16 %v1458
    %v1541 = vunpack.c.l.b16 %v1459
    %v1542 = vunpack.c.h.b16 %v1459
    %v1543 = vunpack.c.l.b16 %v1460
    %v1544 = vunpack.c.h.b16 %v1460
    %v1545 = vunpack.c.l.b16 %v1461
    %v1546 = vunpack.c.h.b16 %v1461
    %v1547 = vunpack.c.l.b16 %v1462
    %v1548 = vunpack.c.h.b16 %v1462
    %v1549 = vunpack.c.l.b16 %v1463
    %v1550 = vunpack.c.h.b16 %v1463
    %v1551 = vunpack.c.l.b16 %v1464
    %v1552 = vunpack.c.h.b16 %v1464
    %v1553 = vunpack.c.l.b16 %v1465
    %v1554 = vunpack.c.h.b16 %v1465
    %v1555 = vunpack.c.l.b16 %v1466
    %v1556 = vunpack.c.h.b16 %v1466
    %v1557 = vunpack.c.l.b16 %v1467
    %v1558 = vunpack.c.h.b16 %v1467
    %v1559 = vunpack.c.l.b16 %v1468
    %v1560 = vunpack.c.h.b16 %v1468
    %v1561 = vunpack.c.l.b16 %v1469
    %v1562 = vunpack.c.h.b16 %v1469
    %v1563 = vunpack.c.l.b16 %v1470
    %v1564 = vunpack.c.h.b16 %v1470
    %v1565 = vunpack.c.l.b16 %v1471
    %v1566 = vunpack.c.h.b16 %v1471
    %v1567 = vunpack.c.l.b16 %v1472
    %v1568 = vunpack.c.h.b16 %v1472
    %v1569 = vunpack.c.l.b16 %v1473
    %v1570 = vunpack.c.h.b16 %v1473
    %v1571 = vunpack.c.l.b16 %v1474
    %v1572 = vunpack.c.h.b16 %v1474
    %v1573 = vunpack.c.l.b16 %v1475
    %v1574 = vunpack.c.h.b16 %v1475
    %v1575 = vunpack.c.l.b16 %v1476
    %v1576 = vunpack.c.h.b16 %v1476
    %v1577 = vpack.c.b16 %v1517, %v1513
    %v1578 = vpack.c.b16 %v1518, %v1514
    %v1579 = vpack.c.b16 %v1519, %v1515
    %v1580 = vpack.c.b16 %v1520, %v1516
    %v1581 = vpack.c.b16 %v1525, %v1521
    %v1582 = vpack.c.b16 %v1526, %v1522
    %v1583 = vpack.c.b16 %v1527, %v1523
    %v1584 = vpack.c.b16 %v1528, %v1524
    %v1585 = vpack.c.b16 %v1533, %v1529
    %v1586 = vpack.c.b16 %v1534, %v1530
    %v1587 = vpack.c.b16 %v1535, %v1531
    %v1588 = vpack.c.b16 %v1536, %v1532
    %v1589 = vpack.c.b16 %v1541, %v1537
    %v1590 = vpack.c.b16 %v1542, %v1538
    %v1591 = vpack.c.b16 %v1543, %v1539
    %v1592 = vpack.c.b16 %v1544, %v1540
    %v1593 = vpack.c.b16 %v1549, %v1545
    %v1594 = vpack.c.b16 %v1550, %v1546
    %v1595 = vpack.c.b16 %v1551, %v1547
    %v1596 = vpack.c.b16 %v1552, %v1548
    %v1597 = vpack.c.b16 %v1557, %v1553
    %v1598 = vpack.c.b16 %v1558, %v1554
    %v1599 = vpack.c.b16 %v1559, %v1555
    %v1600 = vpack.c.b16 %v1560, %v1556
    %v1601 = vpack.c.b16 %v1565, %v1561
    %v1602 = vpack.c.b16 %v1566, %v1562
    %v1603 = vpack.c.b16 %v1567, %v1563
    %v1604 = vpack.c.b16 %v1568, %v1564
    %v1605 = vpack.c.b16 %v1573, %v1569
    %v1606 = vpack.c.b16 %v1574, %v1570
    %v1607 = vpack.c.b16 %v1575, %v1571
    %v1608 = vpack.c.b16 %v1576, %v1572
    %1641 = vmatprep.subr.bf16.mxu0 %v1578
    %1642 = vmatpush1.bf16.msra.mxu0 %v1577
    %1643 = vmatprep.subr.bf16.mxu0 %v1582
    %1644 = vmatpush1.bf16.msra.mxu0 %v1581
    %1645 = vmatprep.subr.bf16.mxu0 %v1586
    %1646 = vmatpush1.bf16.msra.mxu0 %v1585
    %1647 = vmatprep.subr.bf16.mxu0 %v1590
    %1648 = vmatpush1.bf16.msra.mxu0 %v1589
    %1649 = vmatprep.subr.bf16.mxu0 %v1594
    %1650 = vmatpush1.bf16.msra.mxu0 %v1593
    %1651 = vmatprep.subr.bf16.mxu0 %v1598
    %1652 = vmatpush1.bf16.msra.mxu0 %v1597
    %1653 = vmatprep.subr.bf16.mxu0 %v1602
    %1654 = vmatpush1.bf16.msra.mxu0 %v1601
    %1655 = vmatprep.subr.bf16.mxu0 %v1606
    %1656 = vmatpush1.bf16.msra.mxu0 %v1605
    %1657 = vmatprep.subr.bf16.mxu0 0
    %1658 = vmatpush1.bf16.msra.mxu0 0
    %1659 = vmatprep.subr.bf16.mxu0 0
    %1660 = vmatpush1.bf16.msra.mxu0 0
    %1661 = vmatprep.subr.bf16.mxu0 0
    %1662 = vmatpush1.bf16.msra.mxu0 0
    %1663 = vmatprep.subr.bf16.mxu0 0
    %1664 = vmatpush1.bf16.msra.mxu0 0
    %1665 = vmatprep.subr.bf16.mxu0 0
    %1666 = vmatpush1.bf16.msra.mxu0 0
    %1667 = vmatprep.subr.bf16.mxu0 0
    %1668 = vmatpush1.bf16.msra.mxu0 0
    %1669 = vmatprep.subr.bf16.mxu0 0
    %1670 = vmatpush1.bf16.msra.mxu0 0
    %1671 = vmatprep.subr.bf16.mxu0 0
    %1672 = vmatpush1.bf16.msra.mxu0 0
    %1673 = vmatprep.mubr.bf16.mxu0 0
    %1674 = vmatmul.mubr.bf16.gmra.mrb[0].mxu0 0
    %v1675 = vpop.f32.mrb[0].mxu0
    %v1676 = vadd.f32 0.0, %v1675
    %v1677 = vpop.f32.mrb[0].mxu0
    %v1678 = vadd.f32 0.0, %v1677
    %v1679 = vpop.f32.mrb[0].mxu0
    %v1680 = vpop.f32.mrb[0].mxu0
    %1681 = vdwg.mxu0
    %1682 = vmatprep.subr.bf16.mxu0 %v1580
    %1683 = vmatpush1.bf16.msra.mxu0 %v1579
    %1684 = vmatprep.subr.bf16.mxu0 %v1584
    %1685 = vmatpush1.bf16.msra.mxu0 %v1583
    %1686 = vmatprep.subr.bf16.mxu0 %v1588
    %1687 = vmatpush1.bf16.msra.mxu0 %v1587
    %1688 = vmatprep.subr.bf16.mxu0 %v1592
    %1689 = vmatpush1.bf16.msra.mxu0 %v1591
    %1690 = vmatprep.subr.bf16.mxu0 %v1596
    %1691 = vmatpush1.bf16.msra.mxu0 %v1595
    %1692 = vmatprep.subr.bf16.mxu0 %v1600
    %1693 = vmatpush1.bf16.msra.mxu0 %v1599
    %1694 = vmatprep.subr.bf16.mxu0 %v1604
    %1695 = vmatpush1.bf16.msra.mxu0 %v1603
    %1696 = vmatprep.subr.bf16.mxu0 %v1608
    %1697 = vmatpush1.bf16.msra.mxu0 %v1607
    %1698 = vmatprep.subr.bf16.mxu0 0
    %1699 = vmatpush1.bf16.msra.mxu0 0
    %1700 = vmatprep.subr.bf16.mxu0 0
    %1701 = vmatpush1.bf16.msra.mxu0 0
    %1702 = vmatprep.subr.bf16.mxu0 0
    %1703 = vmatpush1.bf16.msra.mxu0 0
    %1704 = vmatprep.subr.bf16.mxu0 0
    %1705 = vmatpush1.bf16.msra.mxu0 0
    %1706 = vmatprep.subr.bf16.mxu0 0
    %1707 = vmatpush1.bf16.msra.mxu0 0
    %1708 = vmatprep.subr.bf16.mxu0 0
    %1709 = vmatpush1.bf16.msra.mxu0 0
    %1710 = vmatprep.subr.bf16.mxu0 0
    %1711 = vmatpush1.bf16.msra.mxu0 0
    %1712 = vmatprep.subr.bf16.mxu0 0
    %1713 = vmatpush1.bf16.msra.mxu0 0
    %1714 = vmatprep.mubr.bf16.mxu0 0
    %1715 = vmatmul.mubr.bf16.gmra.mrb[0].mxu0 0
    %v1716 = vpop.f32.mrb[0].mxu0
    %v1717 = vadd.f32 0.0, %v1716
    %v1718 = vpop.f32.mrb[0].mxu0
    %v1719 = vadd.f32 0.0, %v1718
    %v1720 = vpop.f32.mrb[0].mxu0
    %v1721 = vpop.f32.mrb[0].mxu0
    %1722 = vdwg.mxu0
    %v1723 = vadd.f32 %v1477, %v1676
    %v1724 = vadd.f32 %v1478, %v1678
    %v1725 = vadd.f32 %v1479, %v1717
    %v1726 = vadd.f32 %v1480, %v1719
    %v1727 = vxor.u32 %v1723, 2147483648
    %v1728 = vxor.u32 %v1724, 2147483648
    %v1729 = vxor.u32 %v1725, 2147483648
    %v1730 = vmul.f32 %v1727, 1.442695
    %v1731 = vpow.pop %v1730
    %v1732 = vmul.f32 %v1728, 1.442695
    %v1733 = vpow.pop %v1732
    %v1734 = vmul.f32 %v1729, 1.442695
    %v1735 = vpow.pop %v1734
    %v1736 = vadd.f32 %v1731, 1.0
    %v1737 = vadd.f32 %v1733, 1.0
    %v1738 = vadd.f32 %v1735, 1.0
    %v1739 = vrcp.pop %v1736
    %v1740 = vmul.f32 1.0, %v1739
    %v1741 = vrcp.pop %v1737
    %v1742 = vmul.f32 1.0, %v1741
    %v1743 = vrcp.pop %v1738
    %v1744 = vmul.f32 1.0, %v1743
    %v1745 = vtanh.pop %v1726
    %v1746 = vmul.f32 %v1742, 0.0
    %v1747 = vmul.f32 %v1740, %v1745
    %v1748 = vadd.f32 %v1746, %v1747
    %v1749 = vtanh.pop %v1748
    %v1750 = vmul.f32 %v1744, %v1749
    %v1751 = vld [vmem:[#allocation2 + $0x20] sm:$0xff]
    %v1752 = vld [vmem:[#allocation2 + $0x28] sm:$0xff]
    %v1753 = vld [vmem:[#allocation2 + $0x30] sm:$0xff]
    %v1754 = vld [vmem:[#allocation2 + $0x38] sm:$0xff]
    %v1755 = vpack.c.bf16 %v1750, %v1750
    %1756 = vmatprep.subr.bf16.mxu0 %v1578
    %1757 = vmatpush1.bf16.msra.mxu0 %v1577
    %1758 = vmatprep.subr.bf16.mxu0 %v1582
    %1759 = vmatpush1.bf16.msra.mxu0 %v1581
    %1760 = vmatprep.subr.bf16.mxu0 %v1586
    %1761 = vmatpush1.bf16.msra.mxu0 %v1585
    %1762 = vmatprep.subr.bf16.mxu0 %v1590
    %1763 = vmatpush1.bf16.msra.mxu0 %v1589
    %1764 = vmatprep.subr.bf16.mxu0 %v1594
    %1765 = vmatpush1.bf16.msra.mxu0 %v1593
    %1766 = vmatprep.subr.bf16.mxu0 %v1598
    %1767 = vmatpush1.bf16.msra.mxu0 %v1597
    %1768 = vmatprep.subr.bf16.mxu0 %v1602
    %1769 = vmatpush1.bf16.msra.mxu0 %v1601
    %1770 = vmatprep.subr.bf16.mxu0 %v1606
    %1771 = vmatpush1.bf16.msra.mxu0 %v1605
    %1772 = vmatprep.subr.bf16.mxu0 0
    %1773 = vmatpush1.bf16.msra.mxu0 0
    %1774 = vmatprep.subr.bf16.mxu0 0
    %1775 = vmatpush1.bf16.msra.mxu0 0
    %1776 = vmatprep.subr.bf16.mxu0 0
    %1777 = vmatpush1.bf16.msra.mxu0 0
    %1778 = vmatprep.subr.bf16.mxu0 0
    %1779 = vmatpush1.bf16.msra.mxu0 0
    %1780 = vmatprep.subr.bf16.mxu0 0
    %1781 = vmatpush1.bf16.msra.mxu0 0
    %1782 = vmatprep.subr.bf16.mxu0 0
    %1783 = vmatpush1.bf16.msra.mxu0 0
    %1784 = vmatprep.subr.bf16.mxu0 0
    %1785 = vmatpush1.bf16.msra.mxu0 0
    %1786 = vmatprep.subr.bf16.mxu0 0
    %1787 = vmatpush1.bf16.msra.mxu0 0
    %1788 = vmatprep.mubr.bf16.mxu0 0
    %1789 = vmatmul.mubr.bf16.gmra.mrb[0].mxu0 %v1755
    %v1790 = vpop.f32.mrb[0].mxu0
    %v1791 = vadd.f32 0.0, %v1790
    %v1792 = vpop.f32.mrb[0].mxu0
    %v1793 = vadd.f32 0.0, %v1792
    %v1794 = vpop.f32.mrb[0].mxu0
    %v1795 = vpop.f32.mrb[0].mxu0
    %1796 = vdwg.mxu0
    %1797 = vmatprep.subr.bf16.mxu0 %v1580
    %1798 = vmatpush1.bf16.msra.mxu0 %v1579
    %1799 = vmatprep.subr.bf16.mxu0 %v1584
    %1800 = vmatpush1.bf16.msra.mxu0 %v1583
    %1801 = vmatprep.subr.bf16.mxu0 %v1588
    %1802 = vmatpush1.bf16.msra.mxu0 %v1587
    %1803 = vmatprep.subr.bf16.mxu0 %v1592
    %1804 = vmatpush1.bf16.msra.mxu0 %v1591
    %1805 = vmatprep.subr.bf16.mxu0 %v1596
    %1806 = vmatpush1.bf16.msra.mxu0 %v1595
    %1807 = vmatprep.subr.bf16.mxu0 %v1600
    %1808 = vmatpush1.bf16.msra.mxu0 %v1599
    %1809 = vmatprep.subr.bf16.mxu0 %v1604
    %1810 = vmatpush1.bf16.msra.mxu0 %v1603
    %1811 = vmatprep.subr.bf16.mxu0 %v1608
    %1812 = vmatpush1.bf16.msra.mxu0 %v1607
    %1813 = vmatprep.subr.bf16.mxu0 0
    %1814 = vmatpush1.bf16.msra.mxu0 0
    %1815 = vmatprep.subr.bf16.mxu0 0
    %1816 = vmatpush1.bf16.msra.mxu0 0
    %1817 = vmatprep.subr.bf16.mxu0 0
    %1818 = vmatpush1.bf16.msra.mxu0 0
    %1819 = vmatprep.subr.bf16.mxu0 0
    %1820 = vmatpush1.bf16.msra.mxu0 0
    %1821 = vmatprep.subr.bf16.mxu0 0
    %1822 = vmatpush1.bf16.msra.mxu0 0
    %1823 = vmatprep.subr.bf16.mxu0 0
    %1824 = vmatpush1.bf16.msra.mxu0 0
    %1825 = vmatprep.subr.bf16.mxu0 0
    %1826 = vmatpush1.bf16.msra.mxu0 0
    %1827 = vmatprep.subr.bf16.mxu0 0
    %1828 = vmatpush1.bf16.msra.mxu0 0
    %1829 = vmatprep.mubr.bf16.mxu0 0
    %1830 = vmatmul.mubr.bf16.gmra.mrb[0].mxu0 %v1755
    %v1831 = vpop.f32.mrb[0].mxu0
    %v1832 = vadd.f32 0.0, %v1831
    %v1833 = vpop.f32.mrb[0].mxu0
    %v1834 = vadd.f32 0.0, %v1833
    %v1835 = vpop.f32.mrb[0].mxu0
    %v1836 = vpop.f32.mrb[0].mxu0
    %1837 = vdwg.mxu0
    %v1838 = vadd.f32 %v1751, %v1791
    %v1839 = vadd.f32 %v1752, %v1793
    %v1840 = vadd.f32 %v1753, %v1832
    %v1841 = vadd.f32 %v1754, %v1834
    %v1842 = vxor.u32 %v1838, 2147483648
    %v1843 = vxor.u32 %v1839, 2147483648
    %v1844 = vxor.u32 %v1840, 2147483648
    %v1845 = vmul.f32 %v1842, 1.442695
    %v1846 = vpow.pop %v1845
    %v1847 = vmul.f32 %v1843, 1.442695
    %v1848 = vpow.pop %v1847
    %v1849 = vmul.f32 %v1844, 1.442695
    %v1850 = vpow.pop %v1849
    %v1851 = vadd.f32 %v1846, 1.0
    %v1852 = vadd.f32 %v1848, 1.0
    %v1853 = vadd.f32 %v1850, 1.0
    %v1854 = vrcp.pop %v1851
    %v1855 = vmul.f32 1.0, %v1854
    %v1856 = vrcp.pop %v1852
    %v1857 = vmul.f32 1.0, %v1856
    %v1858 = vrcp.pop %v1853
    %v1859 = vmul.f32 1.0, %v1858
    %v1860 = vtanh.pop %v1841
    %v1861 = vmul.f32 %v1857, %v1748
    %v1862 = vmul.f32 %v1855, %v1860
    %v1863 = vadd.f32 %v1861, %v1862
    %v1864 = vtanh.pop %v1863
    %v1865 = vmul.f32 %v1859, %v1864
    %v1866 = vld [vmem:[#allocation2 + $0x40] sm:$0xff]
    %v1867 = vld [vmem:[#allocation2 + $0x48] sm:$0xff]
    %v1868 = vld [vmem:[#allocation2 + $0x50] sm:$0xff]
    %v1869 = vld [vmem:[#allocation2 + $0x58] sm:$0xff]
    %v1870 = vpack.c.bf16 %v1865, %v1865
    %1871 = vmatprep.subr.bf16.mxu0 %v1578
    %1872 = vmatpush1.bf16.msra.mxu0 %v1577
    %1873 = vmatprep.subr.bf16.mxu0 %v1582
    %1874 = vmatpush1.bf16.msra.mxu0 %v1581
    %1875 = vmatprep.subr.bf16.mxu0 %v1586
    %1876 = vmatpush1.bf16.msra.mxu0 %v1585
    %1877 = vmatprep.subr.bf16.mxu0 %v1590
    %1878 = vmatpush1.bf16.msra.mxu0 %v1589
    %1879 = vmatprep.subr.bf16.mxu0 %v1594
    %1880 = vmatpush1.bf16.msra.mxu0 %v1593
    %1881 = vmatprep.subr.bf16.mxu0 %v1598
    %1882 = vmatpush1.bf16.msra.mxu0 %v1597
    %1883 = vmatprep.subr.bf16.mxu0 %v1602
    %1884 = vmatpush1.bf16.msra.mxu0 %v1601
    %1885 = vmatprep.subr.bf16.mxu0 %v1606
    %1886 = vmatpush1.bf16.msra.mxu0 %v1605
    %1887 = vmatprep.subr.bf16.mxu0 0
    %1888 = vmatpush1.bf16.msra.mxu0 0
    %1889 = vmatprep.subr.bf16.mxu0 0
    %1890 = vmatpush1.bf16.msra.mxu0 0
    %1891 = vmatprep.subr.bf16.mxu0 0
    %1892 = vmatpush1.bf16.msra.mxu0 0
    %1893 = vmatprep.subr.bf16.mxu0 0
    %1894 = vmatpush1.bf16.msra.mxu0 0
    %1895 = vmatprep.subr.bf16.mxu0 0
    %1896 = vmatpush1.bf16.msra.mxu0 0
    %1897 = vmatprep.subr.bf16.mxu0 0
    %1898 = vmatpush1.bf16.msra.mxu0 0
    %1899 = vmatprep.subr.bf16.mxu0 0
    %1900 = vmatpush1.bf16.msra.mxu0 0
    %1901 = vmatprep.subr.bf16.mxu0 0
    %1902 = vmatpush1.bf16.msra.mxu0 0
    %1903 = vmatprep.mubr.bf16.mxu0 0
    %1904 = vmatmul.mubr.bf16.gmra.mrb[0].mxu0 %v1870
    %v1905 = vpop.f32.mrb[0].mxu0
    %v1906 = vadd.f32 0.0, %v1905
    %v1907 = vpop.f32.mrb[0].mxu0
    %v1908 = vadd.f32 0.0, %v1907
    %v1909 = vpop.f32.mrb[0].mxu0
    %v1910 = vpop.f32.mrb[0].mxu0
    %1911 = vdwg.mxu0
    %1912 = vmatprep.subr.bf16.mxu0 %v1580
    %1913 = vmatpush1.bf16.msra.mxu0 %v1579
    %1914 = vmatprep.subr.bf16.mxu0 %v1584
    %1915 = vmatpush1.bf16.msra.mxu0 %v1583
    %1916 = vmatprep.subr.bf16.mxu0 %v1588
    %1917 = vmatpush1.bf16.msra.mxu0 %v1587
    %1918 = vmatprep.subr.bf16.mxu0 %v1592
    %1919 = vmatpush1.bf16.msra.mxu0 %v1591
    %1920 = vmatprep.subr.bf16.mxu0 %v1596
    %1921 = vmatpush1.bf16.msra.mxu0 %v1595
    %1922 = vmatprep.subr.bf16.mxu0 %v1600
    %1923 = vmatpush1.bf16.msra.mxu0 %v1599
    %1924 = vmatprep.subr.bf16.mxu0 %v1604
    %1925 = vmatpush1.bf16.msra.mxu0 %v1603
    %1926 = vmatprep.subr.bf16.mxu0 %v1608
    %1927 = vmatpush1.bf16.msra.mxu0 %v1607
    %1928 = vmatprep.subr.bf16.mxu0 0
    %1929 = vmatpush1.bf16.msra.mxu0 0
    %1930 = vmatprep.subr.bf16.mxu0 0
    %1931 = vmatpush1.bf16.msra.mxu0 0
    %1932 = vmatprep.subr.bf16.mxu0 0
    %1933 = vmatpush1.bf16.msra.mxu0 0
    %1934 = vmatprep.subr.bf16.mxu0 0
    %1935 = vmatpush1.bf16.msra.mxu0 0
    %1936 = vmatprep.subr.bf16.mxu0 0
    %1937 = vmatpush1.bf16.msra.mxu0 0
    %1938 = vmatprep.subr.bf16.mxu0 0
    %1939 = vmatpush1.bf16.msra.mxu0 0
    %1940 = vmatprep.subr.bf16.mxu0 0
    %1941 = vmatpush1.bf16.msra.mxu0 0
    %1942 = vmatprep.subr.bf16.mxu0 0
    %1943 = vmatpush1.bf16.msra.mxu0 0
    %1944 = vmatprep.mubr.bf16.mxu0 0
    %1945 = vmatmul.mubr.bf16.gmra.mrb[0].mxu0 %v1870
    %v1946 = vpop.f32.mrb[0].mxu0
    %v1947 = vadd.f32 0.0, %v1946
    %v1948 = vpop.f32.mrb[0].mxu0
    %v1949 = vadd.f32 0.0, %v1948
    %v1950 = vpop.f32.mrb[0].mxu0
    %v1951 = vpop.f32.mrb[0].mxu0
    %1952 = vdwg.mxu0
    %v1953 = vadd.f32 %v1866, %v1906
    %v1954 = vadd.f32 %v1867, %v1908
    %v1955 = vadd.f32 %v1868, %v1947
    %v1956 = vadd.f32 %v1869, %v1949
    %v1957 = vxor.u32 %v1953, 2147483648
    %v1958 = vxor.u32 %v1954, 2147483648
    %v1959 = vxor.u32 %v1955, 2147483648
    %v1960 = vmul.f32 %v1957, 1.442695
    %v1961 = vpow.pop %v1960
    %v1962 = vmul.f32 %v1958, 1.442695
    %v1963 = vpow.pop %v1962
    %v1964 = vmul.f32 %v1959, 1.442695
    %v1965 = vpow.pop %v1964
    %v1966 = vadd.f32 %v1961, 1.0
    %v1967 = vadd.f32 %v1963, 1.0
    %v1968 = vadd.f32 %v1965, 1.0
    %v1969 = vrcp.pop %v1966
    %v1970 = vmul.f32 1.0, %v1969
    %v1971 = vrcp.pop %v1967
    %v1972 = vmul.f32 1.0, %v1971
    %v1973 = vrcp.pop %v1968
    %v1974 = vmul.f32 1.0, %v1973
    %v1975 = vtanh.pop %v1956
    %v1976 = vmul.f32 %v1972, %v1863
    %v1977 = vmul.f32 %v1970, %v1975
    %v1978 = vadd.f32 %v1976, %v1977
    %v1979 = vtanh.pop %v1978
    %v1980 = vmul.f32 %v1974, %v1979
    %v1981 = vld [vmem:[#allocation2 + $0x60] sm:$0xff]
    %v1982 = vld [vmem:[#allocation2 + $0x68] sm:$0xff]
    %v1983 = vld [vmem:[#allocation2 + $0x70] sm:$0xff]
    %v1984 = vld [vmem:[#allocation2 + $0x78] sm:$0xff]
    %v1985 = vpack.c.bf16 %v1980, %v1980
    %1986 = vmatprep.subr.bf16.mxu0 %v1578
    %1987 = vmatpush1.bf16.msra.mxu0 %v1577
    %1988 = vmatprep.subr.bf16.mxu0 %v1582
    %1989 = vmatpush1.bf16.msra.mxu0 %v1581
    %1990 = vmatprep.subr.bf16.mxu0 %v1586
    %1991 = vmatpush1.bf16.msra.mxu0 %v1585
    %1992 = vmatprep.subr.bf16.mxu0 %v1590
    %1993 = vmatpush1.bf16.msra.mxu0 %v1589
    %1994 = vmatprep.subr.bf16.mxu0 %v1594
    %1995 = vmatpush1.bf16.msra.mxu0 %v1593
    %1996 = vmatprep.subr.bf16.mxu0 %v1598
    %1997 = vmatpush1.bf16.msra.mxu0 %v1597
    %1998 = vmatprep.subr.bf16.mxu0 %v1602
    %1999 = vmatpush1.bf16.msra.mxu0 %v1601
    %2000 = vmatprep.subr.bf16.mxu0 %v1606
    %2001 = vmatpush1.bf16.msra.mxu0 %v1605
    %2002 = vmatprep.subr.bf16.mxu0 0
    %2003 = vmatpush1.bf16.msra.mxu0 0
    %2004 = vmatprep.subr.bf16.mxu0 0
    %2005 = vmatpush1.bf16.msra.mxu0 0
    %2006 = vmatprep.subr.bf16.mxu0 0
    %2007 = vmatpush1.bf16.msra.mxu0 0
    %2008 = vmatprep.subr.bf16.mxu0 0
    %2009 = vmatpush1.bf16.msra.mxu0 0
    %2010 = vmatprep.subr.bf16.mxu0 0
    %2011 = vmatpush1.bf16.msra.mxu0 0
    %2012 = vmatprep.subr.bf16.mxu0 0
    %2013 = vmatpush1.bf16.msra.mxu0 0
    %2014 = vmatprep.subr.bf16.mxu0 0
    %2015 = vmatpush1.bf16.msra.mxu0 0
    %2016 = vmatprep.subr.bf16.mxu0 0
    %2017 = vmatpush1.bf16.msra.mxu0 0
    %2018 = vmatprep.mubr.bf16.mxu0 0
    %2019 = vmatmul.mubr.bf16.gmra.mrb[0].mxu0 %v1985
    %v2020 = vpop.f32.mrb[0].mxu0
    %v2021 = vadd.f32 0.0, %v2020
    %v2022 = vpop.f32.mrb[0].mxu0
    %v2023 = vadd.f32 0.0, %v2022
    %v2024 = vpop.f32.mrb[0].mxu0
    %v2025 = vpop.f32.mrb[0].mxu0
    %2026 = vdwg.mxu0
    %2027 = vmatprep.subr.bf16.mxu0 %v1580
    %2028 = vmatpush1.bf16.msra.mxu0 %v1579
    %2029 = vmatprep.subr.bf16.mxu0 %v1584
    %2030 = vmatpush1.bf16.msra.mxu0 %v1583
    %2031 = vmatprep.subr.bf16.mxu0 %v1588
    %2032 = vmatpush1.bf16.msra.mxu0 %v1587
    %2033 = vmatprep.subr.bf16.mxu0 %v1592
    %2034 = vmatpush1.bf16.msra.mxu0 %v1591
    %2035 = vmatprep.subr.bf16.mxu0 %v1596
    %2036 = vmatpush1.bf16.msra.mxu0 %v1595
    %2037 = vmatprep.subr.bf16.mxu0 %v1600
    %2038 = vmatpush1.bf16.msra.mxu0 %v1599
    %2039 = vmatprep.subr.bf16.mxu0 %v1604
    %2040 = vmatpush1.bf16.msra.mxu0 %v1603
    %2041 = vmatprep.subr.bf16.mxu0 %v1608
    %2042 = vmatpush1.bf16.msra.mxu0 %v1607
    %2043 = vmatprep.subr.bf16.mxu0 0
    %2044 = vmatpush1.bf16.msra.mxu0 0
    %2045 = vmatprep.subr.bf16.mxu0 0
    %2046 = vmatpush1.bf16.msra.mxu0 0
    %2047 = vmatprep.subr.bf16.mxu0 0
    %2048 = vmatpush1.bf16.msra.mxu0 0
    %2049 = vmatprep.subr.bf16.mxu0 0
    %2050 = vmatpush1.bf16.msra.mxu0 0
    %2051 = vmatprep.subr.bf16.mxu0 0
    %2052 = vmatpush1.bf16.msra.mxu0 0
    %2053 = vmatprep.subr.bf16.mxu0 0
    %2054 = vmatpush1.bf16.msra.mxu0 0
    %2055 = vmatprep.subr.bf16.mxu0 0
    %2056 = vmatpush1.bf16.msra.mxu0 0
    %2057 = vmatprep.subr.bf16.mxu0 0
    %2058 = vmatpush1.bf16.msra.mxu0 0
    %2059 = vmatprep.mubr.bf16.mxu0 0
    %2060 = vmatmul.mubr.bf16.gmra.mrb[0].mxu0 %v1985
    %v2061 = vpop.f32.mrb[0].mxu0
    %v2062 = vadd.f32 0.0, %v2061
    %v2063 = vpop.f32.mrb[0].mxu0
    %v2064 = vadd.f32 0.0, %v2063
    %v2065 = vpop.f32.mrb[0].mxu0
    %v2066 = vpop.f32.mrb[0].mxu0
    %2067 = vdwg.mxu0
    %v2068 = vadd.f32 %v1981, %v2021
    %v2069 = vadd.f32 %v1982, %v2023
    %v2070 = vadd.f32 %v1983, %v2062
    %v2071 = vadd.f32 %v1984, %v2064
    %v2072 = vxor.u32 %v2068, 2147483648
    %v2073 = vxor.u32 %v2069, 2147483648
    %v2074 = vxor.u32 %v2070, 2147483648
    %v2075 = vmul.f32 %v2072, 1.442695
    %v2076 = vpow.pop %v2075
    %v2077 = vmul.f32 %v2073, 1.442695
    %v2078 = vpow.pop %v2077
    %v2079 = vmul.f32 %v2074, 1.442695
    %v2080 = vpow.pop %v2079
    %v2081 = vadd.f32 %v2076, 1.0
    %v2082 = vadd.f32 %v2078, 1.0
    %v2083 = vadd.f32 %v2080, 1.0
    %v2084 = vrcp.pop %v2081
    %v2085 = vmul.f32 1.0, %v2084
    %v2086 = vrcp.pop %v2082
    %v2087 = vmul.f32 1.0, %v2086
    %v2088 = vrcp.pop %v2083
    %v2089 = vmul.f32 1.0, %v2088
    %v2090 = vtanh.pop %v2071
    %v2091 = vmul.f32 %v2087, %v1978
    %v2092 = vmul.f32 %v2085, %v2090
    %v2093 = vadd.f32 %v2091, %v2092
    %v2094 = vtanh.pop %v2093
    %v2095 = vmul.f32 %v2089, %v2094
    %v2096 = vld [vmem:[#allocation2 + $0x80] sm:$0xff]
    %v2097 = vld [vmem:[#allocation2 + $0x88] sm:$0xff]
    %v2098 = vld [vmem:[#allocation2 + $0x90] sm:$0xff]
    %v2099 = vld [vmem:[#allocation2 + $0x98] sm:$0xff]
    %v2100 = vpack.c.bf16 %v2095, %v2095
    %2101 = vmatprep.subr.bf16.mxu0 %v1578
    %2102 = vmatpush1.bf16.msra.mxu0 %v1577
    %2103 = vmatprep.subr.bf16.mxu0 %v1582
    %2104 = vmatpush1.bf16.msra.mxu0 %v1581
    %2105 = vmatprep.subr.bf16.mxu0 %v1586
    %2106 = vmatpush1.bf16.msra.mxu0 %v1585
    %2107 = vmatprep.subr.bf16.mxu0 %v1590
    %2108 = vmatpush1.bf16.msra.mxu0 %v1589
    %2109 = vmatprep.subr.bf16.mxu0 %v1594
    %2110 = vmatpush1.bf16.msra.mxu0 %v1593
    %2111 = vmatprep.subr.bf16.mxu0 %v1598
    %2112 = vmatpush1.bf16.msra.mxu0 %v1597
    %2113 = vmatprep.subr.bf16.mxu0 %v1602
    %2114 = vmatpush1.bf16.msra.mxu0 %v1601
    %2115 = vmatprep.subr.bf16.mxu0 %v1606
    %2116 = vmatpush1.bf16.msra.mxu0 %v1605
    %2117 = vmatprep.subr.bf16.mxu0 0
    %2118 = vmatpush1.bf16.msra.mxu0 0
    %2119 = vmatprep.subr.bf16.mxu0 0
    %2120 = vmatpush1.bf16.msra.mxu0 0
    %2121 = vmatprep.subr.bf16.mxu0 0
    %2122 = vmatpush1.bf16.msra.mxu0 0
    %2123 = vmatprep.subr.bf16.mxu0 0
    %2124 = vmatpush1.bf16.msra.mxu0 0
    %2125 = vmatprep.subr.bf16.mxu0 0
    %2126 = vmatpush1.bf16.msra.mxu0 0
    %2127 = vmatprep.subr.bf16.mxu0 0
    %2128 = vmatpush1.bf16.msra.mxu0 0
    %2129 = vmatprep.subr.bf16.mxu0 0
    %2130 = vmatpush1.bf16.msra.mxu0 0
    %2131 = vmatprep.subr.bf16.mxu0 0
    %2132 = vmatpush1.bf16.msra.mxu0 0
    %2133 = vmatprep.mubr.bf16.mxu0 0
    %2134 = vmatmul.mubr.bf16.gmra.mrb[0].mxu0 %v2100
    %v2135 = vpop.f32.mrb[0].mxu0
    %v2136 = vadd.f32 0.0, %v2135
    %v2137 = vpop.f32.mrb[0].mxu0
    %v2138 = vadd.f32 0.0, %v2137
    %v2139 = vpop.f32.mrb[0].mxu0
    %v2140 = vpop.f32.mrb[0].mxu0
    %2141 = vdwg.mxu0
    %2142 = vmatprep.subr.bf16.mxu0 %v1580
    %2143 = vmatpush1.bf16.msra.mxu0 %v1579
    %2144 = vmatprep.subr.bf16.mxu0 %v1584
    %2145 = vmatpush1.bf16.msra.mxu0 %v1583
    %2146 = vmatprep.subr.bf16.mxu0 %v1588
    %2147 = vmatpush1.bf16.msra.mxu0 %v1587
    %2148 = vmatprep.subr.bf16.mxu0 %v1592
    %2149 = vmatpush1.bf16.msra.mxu0 %v1591
    %2150 = vmatprep.subr.bf16.mxu0 %v1596
    %2151 = vmatpush1.bf16.msra.mxu0 %v1595
    %2152 = vmatprep.subr.bf16.mxu0 %v1600
    %2153 = vmatpush1.bf16.msra.mxu0 %v1599
    %2154 = vmatprep.subr.bf16.mxu0 %v1604
    %2155 = vmatpush1.bf16.msra.mxu0 %v1603
    %2156 = vmatprep.subr.bf16.mxu0 %v1608
    %2157 = vmatpush1.bf16.msra.mxu0 %v1607
    %2158 = vmatprep.subr.bf16.mxu0 0
    %2159 = vmatpush1.bf16.msra.mxu0 0
    %2160 = vmatprep.subr.bf16.mxu0 0
    %2161 = vmatpush1.bf16.msra.mxu0 0
    %2162 = vmatprep.subr.bf16.mxu0 0
    %2163 = vmatpush1.bf16.msra.mxu0 0
    %2164 = vmatprep.subr.bf16.mxu0 0
    %2165 = vmatpush1.bf16.msra.mxu0 0
    %2166 = vmatprep.subr.bf16.mxu0 0
    %2167 = vmatpush1.bf16.msra.mxu0 0
    %2168 = vmatprep.subr.bf16.mxu0 0
    %2169 = vmatpush1.bf16.msra.mxu0 0
    %2170 = vmatprep.subr.bf16.mxu0 0
    %2171 = vmatpush1.bf16.msra.mxu0 0
    %2172 = vmatprep.subr.bf16.mxu0 0
    %2173 = vmatpush1.bf16.msra.mxu0 0
    %2174 = vmatprep.mubr.bf16.mxu0 0
    %2175 = vmatmul.mubr.bf16.gmra.mrb[0].mxu0 %v2100
    %v2176 = vpop.f32.mrb[0].mxu0
    %v2177 = vadd.f32 0.0, %v2176
    %v2178 = vpop.f32.mrb[0].mxu0
    %v2179 = vadd.f32 0.0, %v2178
    %v2180 = vpop.f32.mrb[0].mxu0
    %v2181 = vpop.f32.mrb[0].mxu0
    %2182 = vdwg.mxu0
    %v2183 = vadd.f32 %v2096, %v2136
    %v2184 = vadd.f32 %v2097, %v2138
    %v2185 = vadd.f32 %v2098, %v2177
    %v2186 = vadd.f32 %v2099, %v2179
    %v2187 = vxor.u32 %v2183, 2147483648
    %v2188 = vxor.u32 %v2184, 2147483648
    %v2189 = vxor.u32 %v2185, 2147483648
    %v2190 = vmul.f32 %v2187, 1.442695
    %v2191 = vpow.pop %v2190
    %v2192 = vmul.f32 %v2188, 1.442695
    %v2193 = vpow.pop %v2192
    %v2194 = vmul.f32 %v2189, 1.442695
    %v2195 = vpow.pop %v2194
    %v2196 = vadd.f32 %v2191, 1.0
    %v2197 = vadd.f32 %v2193, 1.0
    %v2198 = vadd.f32 %v2195, 1.0
    %v2199 = vrcp.pop %v2196
    %v2200 = vmul.f32 1.0, %v2199
    %v2201 = vrcp.pop %v2197
    %v2202 = vmul.f32 1.0, %v2201
    %v2203 = vrcp.pop %v2198
    %v2204 = vmul.f32 1.0, %v2203
    %v2205 = vtanh.pop %v2186
    %v2206 = vmul.f32 %v2202, %v2093
    %v2207 = vmul.f32 %v2200, %v2205
    %v2208 = vadd.f32 %v2206, %v2207
    %v2209 = vtanh.pop %v2208
    %v2210 = vmul.f32 %v2204, %v2209
    %v2211 = vpack.c.bf16 %v2210, %v2210
    %v2212 = vld [vmem:[%s6] sm:$0xf]
    %v2213 = vld [vmem:[%s6 + $0x4] sm:$0xf]
    %v2214 = vld [vmem:[%s6 + $0x8] sm:$0xf]
    %v2215 = vld [vmem:[%s6 + $0xc] sm:$0xf]
    %v2216 = vld [vmem:[%s6 + $0x10] sm:$0xf]
    %v2217 = vld [vmem:[%s6 + $0x14] sm:$0xf]
    %v2218 = vld [vmem:[%s6 + $0x18] sm:$0xf]
    %v2219 = vld [vmem:[%s6 + $0x1c] sm:$0xf]
    %v2220 = vld [vmem:[%s6 + $0x20] sm:$0xf]
    %v2221 = vld [vmem:[%s6 + $0x24] sm:$0xf]
    %v2222 = vld [vmem:[%s6 + $0x28] sm:$0xf]
    %v2223 = vld [vmem:[%s6 + $0x2c] sm:$0xf]
    %v2224 = vld [vmem:[%s6 + $0x30] sm:$0xf]
    %v2225 = vld [vmem:[%s6 + $0x34] sm:$0xf]
    %v2226 = vld [vmem:[%s6 + $0x38] sm:$0xf]
    %v2227 = vld [vmem:[%s6 + $0x3c] sm:$0xf]
    %v2228 = vld [vmem:[#allocation11] sm:$0x1]
    %v2230 = vlaneseq
    %v2231 = vshrl.u32 %v2230, 7
    %v2232 = vsub.s32 0, %v2231
    %v2233 = vrot.slane %v2228, %v2232
    %v2251 = vunpack.c.l.b16 %v2212
    %v2252 = vunpack.c.l.b16 %v2213
    %v2253 = vunpack.c.l.b16 %v2214
    %v2254 = vunpack.c.l.b16 %v2215
    %v2255 = vunpack.c.l.b16 %v2216
    %v2256 = vunpack.c.l.b16 %v2217
    %v2257 = vunpack.c.l.b16 %v2218
    %v2258 = vunpack.c.l.b16 %v2219
    %v2259 = vunpack.c.l.b16 %v2220
    %v2260 = vunpack.c.l.b16 %v2221
    %v2261 = vunpack.c.l.b16 %v2222
    %v2262 = vunpack.c.l.b16 %v2223
    %v2263 = vunpack.c.l.b16 %v2224
    %v2264 = vunpack.c.l.b16 %v2225
    %v2265 = vunpack.c.l.b16 %v2226
    %v2266 = vunpack.c.l.b16 %v2227
    %v2267 = vpack.c.b16 %v2252, %v2251
    %v2268 = vpack.c.b16 %v2254, %v2253
    %v2269 = vpack.c.b16 %v2256, %v2255
    %v2270 = vpack.c.b16 %v2258, %v2257
    %v2271 = vpack.c.b16 %v2260, %v2259
    %v2272 = vpack.c.b16 %v2262, %v2261
    %v2273 = vpack.c.b16 %v2264, %v2263
    %v2274 = vpack.c.b16 %v2266, %v2265
    %2283 = vmatprep.subr.bf16.mxu0 0
    %2284 = vmatpush1.bf16.msra.mxu0 %v2267
    %2285 = vmatprep.subr.bf16.mxu0 0
    %2286 = vmatpush1.bf16.msra.mxu0 %v2268
    %2287 = vmatprep.subr.bf16.mxu0 0
    %2288 = vmatpush1.bf16.msra.mxu0 %v2269
    %2289 = vmatprep.subr.bf16.mxu0 0
    %2290 = vmatpush1.bf16.msra.mxu0 %v2270
    %2291 = vmatprep.subr.bf16.mxu0 0
    %2292 = vmatpush1.bf16.msra.mxu0 %v2271
    %2293 = vmatprep.subr.bf16.mxu0 0
    %2294 = vmatpush1.bf16.msra.mxu0 %v2272
    %2295 = vmatprep.subr.bf16.mxu0 0
    %2296 = vmatpush1.bf16.msra.mxu0 %v2273
    %2297 = vmatprep.subr.bf16.mxu0 0
    %2298 = vmatpush1.bf16.msra.mxu0 %v2274
    %2299 = vmatprep.subr.bf16.mxu0 0
    %2300 = vmatpush1.bf16.msra.mxu0 0
    %2301 = vmatprep.subr.bf16.mxu0 0
    %2302 = vmatpush1.bf16.msra.mxu0 0
    %2303 = vmatprep.subr.bf16.mxu0 0
    %2304 = vmatpush1.bf16.msra.mxu0 0
    %2305 = vmatprep.subr.bf16.mxu0 0
    %2306 = vmatpush1.bf16.msra.mxu0 0
    %2307 = vmatprep.subr.bf16.mxu0 0
    %2308 = vmatpush1.bf16.msra.mxu0 0
    %2309 = vmatprep.subr.bf16.mxu0 0
    %2310 = vmatpush1.bf16.msra.mxu0 0
    %2311 = vmatprep.subr.bf16.mxu0 0
    %2312 = vmatpush1.bf16.msra.mxu0 0
    %2313 = vmatprep.subr.bf16.mxu0 0
    %2314 = vmatpush1.bf16.msra.mxu0 0
    %2315 = vmatprep.mubr.bf16.mxu0 0
    %2316 = vmatmul.mubr.bf16.gmra.mrb[0].mxu0 %v2211
    %v2317 = vpop.f32.mrb[0].mxu0
    %v2318 = vadd.f32 %v2233, %v2317
    %v2319 = vpop.f32.mrb[0].mxu0
    %v2320 = vpop.f32.mrb[0].mxu0
    %v2321 = vpop.f32.mrb[0].mxu0
    %2322 = vdwg.mxu0
    %2323 = vst [vmem:[%s8] sm:$0xff] %v2318
    // Predicated region
    $region54: #{custom_model_forward.1} parent=1 // pred_check
      _
    $region55: #{custom_model_forward.1} parent=1 // pred_check_branch
      %2325 = sbr.rel (0) target = $region57
    $region56: #{custom_model_forward.1} parent=1 // pred_region
      _
    $region57: #{custom_model_forward.1} parent=1 // pred_fallthru
      _
    // Predicated region
    $region58: #{custom_model_forward.1} parent=1 // pred_check
      _
    $region59: #{custom_model_forward.1} parent=1 // pred_check_branch
      %2327 = sbr.rel (0) target = $region61
    $region60: #{custom_model_forward.1} parent=1 // pred_region
      _
    $region61: #{custom_model_forward.1} parent=1 // pred_fallthru
      _
    %2328 = vsyncpa [#allocation5], 1
    %2329 = vsyncpa [#allocation7], 1
    %2330 = vsyncpa [#allocation10], 1

</llo_original>
